<compile_context>
chip_gen: v5e
topology: v5e:2x2
jax: 0.10.0
libtpu: 0.0.40
codegen_flags: <defaults>
</compile_context>

<pallas_src>
import jax
import jax.numpy as jnp
from jax.experimental import pallas as pl
from jax.experimental.pallas import tpu as pltpu

NEG_SLOPE = 0.01  # F.leaky_relu default negative_slope


def _leaky(x):
    # max(x, 0.01*x) == leaky_relu(x) for slope < 1; one vmul + one vmax.
    return jnp.maximum(x, NEG_SLOPE * x)


# ------------------------------ fused kernel ---------------------------------

def fused_forward_kernel(x_ref, a_ref,
                         wf_ref, bf_ref,
                         ws0_ref, wn0_ref, b0_ref,
                         ws1_ref, wn1_ref, b1_ref,
                         wc_ref, o_ref):
    """Whole BatchedHomoModel forward for G sampled blocks, fully in VMEM.

    All weight matmuls run on the flattened [G*N, .] activations (M = G*N) in
    bf16 with f32 accumulation; the per-block mean aggregation A @ h is a
    batched einsum over the G axis.
    """
    f32 = jnp.float32
    bf16 = jnp.bfloat16
    G, N, F = x_ref.shape
    D = wf_ref.shape[1]
    E = o_ref.shape[-1]

    x = x_ref[...].reshape(G * N, F)          # bf16, M = G*N (256-wide MXU fill)
    a = a_ref[...]                            # bf16 [G, N, N]

    # MultiFeature.attr2feat['profile'] (single feature -> stack -> squeeze(0))
    h = jnp.dot(x, wf_ref[...], preferred_element_type=f32) + bf_ref[...]

    # fn_act applied once and reused for both conv paths consuming h.
    hl = _leaky(h)                            # f32
    hl_b = hl.astype(bf16)
    # Mean neighbor aggregation of leaky(h): shared by conv0 and conv1(h).
    agg_hl = jnp.einsum('gij,gjd->gid', a, hl_b.reshape(G, N, D),
                        preferred_element_type=f32).reshape(G * N, D)
    agg_hl_b = agg_hl.astype(bf16)

    # h1 = convs[1](block, leaky(h))   (SAGEConv: fc_self + fc_neigh + bias)
    h1 = (jnp.dot(hl_b, ws1_ref[...], preferred_element_type=f32)
          + jnp.dot(agg_hl_b, wn1_ref[...], preferred_element_type=f32)
          + b1_ref[...])

    # t = convs[0](block, leaky(h));  h2 = convs[1](block, leaky(t))
    t = (jnp.dot(hl_b, ws0_ref[...], preferred_element_type=f32)
         + jnp.dot(agg_hl_b, wn0_ref[...], preferred_element_type=f32)
         + b0_ref[...])
    tl = _leaky(t)
    tl_b = tl.astype(bf16)
    agg_tl = jnp.einsum('gij,gjd->gid', a, tl_b.reshape(G, N, D),
                        preferred_element_type=f32).reshape(G * N, D)
    agg_tl_b = agg_tl.astype(bf16)
    h2 = (jnp.dot(tl_b, ws1_ref[...], preferred_element_type=f32)
          + jnp.dot(agg_tl_b, wn1_ref[...], preferred_element_type=f32)
          + b1_ref[...])

    # concat_weight(cat([h0, h1, h2], -1)), bias=False — no materialized concat:
    # accumulate three dots against static slices of the packed [3D, E] weight.
    out = jnp.dot(h.astype(bf16), wc_ref[0:D, :], preferred_element_type=f32)
    out += jnp.dot(h1.astype(bf16), wc_ref[D:2 * D, :], preferred_element_type=f32)
    out += jnp.dot(h2.astype(bf16), wc_ref[2 * D:3 * D, :], preferred_element_type=f32)

    o_ref[...] = out.reshape(G, N, E).astype(o_ref.dtype)


# --------------------------- pallas_call wrapper ------------------------------

def _grouped_spec(shape):
    # per-group-of-blocks operand: leading axis indexed by grid (block size G)
    return pl.BlockSpec(shape, lambda b: (b,) + (0,) * (len(shape) - 1))


def _shared_spec(shape):
    # weights/biases: same full-array block for every grid step
    return pl.BlockSpec(shape, lambda b: (0,) * len(shape))


def batched_homo_forward(params, x_profile, a_norm, *, group_size=2):
    """BatchedHomoModel.calc_from_loader, multi_connection='linear', depth=2.

    x_profile : [B, N, F]  raw 'profile' features of the B sampled blocks
    a_norm    : [B, N, N]  dst-major, in-degree-normalized dense adjacency
    returns   : [B, N, E]  output embeddings (concat_weight projection), f32
    """
    B, N, F = x_profile.shape
    D = params["w_feat"].shape[1]
    E = params["wc"].shape[1]
    G = min(group_size, B)
    assert B % G == 0, "batch of sampled blocks must be divisible by group_size"

    bf16 = jnp.bfloat16
    # bf16 MXU operands; no-op if already stored bf16 (halves the [N,N] DMA).
    x_bf = x_profile.astype(bf16)
    a_bf = a_norm.astype(bf16)
    w = {k: params[k].astype(bf16)
         for k in ("w_feat", "ws0", "wn0", "ws1", "wn1", "wc")}

    # TODO(synk): BatchGraphLoader (DGL neighbor sampling / topk graphs /
    #             to_block) has no Pallas equivalent; each sampled block is a
    #             dense row-normalized adjacency here.
    # TODO(synk): for graphs where the [N, N] adjacency exceeds VMEM, tile A
    #             over dst-row blocks ("parallel") with the src/neighbor axis
    #             as a trailing "arbitrary" reduction dim and a VMEM f32
    #             accumulator, budgeting against v7x's 64 MiB VMEM; not needed
    #             at these block sizes.
    return pl.pallas_call(
        fused_forward_kernel,
        out_shape=jax.ShapeDtypeStruct((B, N, E), jnp.float32),
        grid=(B // G,),
        in_specs=[
            _grouped_spec((G, N, F)),        # x_profile (bf16)
            _grouped_spec((G, N, N)),        # a_norm    (bf16)
            _shared_spec((F, D)),            # w_feat    (bf16)
            _shared_spec((1, D)),            # b_feat    (f32)
            _shared_spec((D, D)),            # ws0
            _shared_spec((D, D)),            # wn0
            _shared_spec((1, D)),            # b0
            _shared_spec((D, D)),            # ws1
            _shared_spec((D, D)),            # wn1
            _shared_spec((1, D)),            # b1
            _shared_spec((3 * D, E)),        # wc (packed concat weight)
        ],
        out_specs=_grouped_spec((G, N, E)),
        compiler_params=pltpu.CompilerParams(
            dimension_semantics=("parallel",),   # shard block-groups across TCs
        ),
    )(x_bf, a_bf,
      w["w_feat"], params["b_feat"],
      w["ws0"], w["wn0"], params["b0"],
      w["ws1"], w["wn1"], params["b1"],
      w["wc"])


# ----------------------------- pure-JAX reference -----------------------------

def reference_forward(params, x_profile, a_norm):
    """Same math (SAGE 'mean', depth-2, linear multi_connection) with the same
    bf16-operand / f32-accumulation precision as the kernel."""
    bf16, f32 = jnp.bfloat16, jnp.float32

    def dot(p, q):
        return jnp.dot(p.astype(bf16), q.astype(bf16), preferred_element_type=f32)

    def agg(a, v):
        return jnp.einsum('bij,bjd->bid', a.astype(bf16), v.astype(bf16),
                          preferred_element_type=f32)

    h = dot(x_profile, params["w_feat"]) + params["b_feat"]
    hl = _leaky(h)
    agg_hl = agg(a_norm, hl)
    h1 = dot(hl, params["ws1"]) + dot(agg_hl, params["wn1"]) + params["b1"]
    t = dot(hl, params["ws0"]) + dot(agg_hl, params["wn0"]) + params["b0"]
    tl = _leaky(t)
    agg_tl = agg(a_norm, tl)
    h2 = dot(tl, params["ws1"]) + dot(agg_tl, params["wn1"]) + params["b1"]
    cat = jnp.concatenate([h, h1, h2], axis=-1)
    return dot(cat, params["wc"])


# ---------------------------------- main --------------------------------------

if __name__ == "__main__":
    key = jax.random.PRNGKey(0)
    keys = jax.random.split(key, 12)

    # Lane-dense sizes: last dims are multiples of 128 so vregs are full and
    # the output store is unmasked; G=2 blocks per grid step gives M=256 weight
    # matmuls (fills the 256x256 MXU on v6e/v7x).
    B = 4     # sampled blocks (loader batches) per launch
    G = 2     # blocks per grid step
    N = 128   # nodes per sampled block
    F = 128   # 'profile' raw feature dim (feat_dict['profile'])
    D = 128   # args.dim_hiddens
    E = 128   # args.dim_embs

    x_profile = jax.random.normal(keys[0], (B, N, F), jnp.float32)

    # dense stand-in for sampled blocks: row i = destination, cols = sources,
    # row-normalized by in-degree -> (A @ h)[i] = mean over incoming neighbors,
    # matching DGL SAGEConv 'mean'.
    adj = (jax.random.uniform(keys[1], (B, N, N)) < 0.1).astype(jnp.float32)
    deg = jnp.clip(jnp.sum(adj, axis=-1, keepdims=True), 1.0, None)
    a_norm = adj / deg

    def glorot(k, shape):
        fan_in, fan_out = shape
        lim = (6.0 / (fan_in + fan_out)) ** 0.5
        return jax.random.uniform(k, shape, jnp.float32, -lim, lim)

    params = dict(
        # MultiFeature.attr2feat['profile'] : Linear(F, D)
        w_feat=glorot(keys[2], (F, D)),
        b_feat=0.01 * jax.random.normal(keys[3], (1, D), jnp.float32),
        # convs[0] : SAGEConv(D, D, 'mean')  (single bias on combined output)
        ws0=glorot(keys[4], (D, D)), wn0=glorot(keys[5], (D, D)),
        b0=0.01 * jax.random.normal(keys[6], (1, D), jnp.float32),
        # convs[1] : SAGEConv(D, D, 'mean')
        ws1=glorot(keys[7], (D, D)), wn1=glorot(keys[8], (D, D)),
        b1=0.01 * jax.random.normal(keys[9], (1, D), jnp.float32),
        # concat_weight : Linear(3*D, E, bias=False), packed as [3D, E]
        wc=glorot(keys[10], (3 * D, E)),
    )

    fwd = jax.jit(lambda p, x, a: batched_homo_forward(p, x, a, group_size=G))
    out = fwd(params, x_profile, a_norm)
    jax.block_until_ready(out)
    assert out.shape == (B, N, E) and out.dtype == jnp.float32

    # sanity check against a pure-JAX reference using the same bf16/f32 precision
    ref = jax.jit(reference_forward)(params, x_profile, a_norm)
    jax.block_until_ready(ref)
    assert jnp.allclose(out, ref, atol=1e-2, rtol=1e-2), (
        float(jnp.max(jnp.abs(out - ref))))

    # TODO(synk): final scatter `embs[output_nodes] = output_embs` is identity
    #             here since every block's nodes are processed densely.
    print("KERNEL_OK")
</pallas_src>

<mosaic_0001>
module attributes {stable_mosaic.version = 11 : i64} {
  func.func @fused_forward_kernel(%arg0: i32, %arg1: memref<2x128x128xbf16, #tpu.memory_space<vmem>>, %arg2: memref<2x128x128xbf16, #tpu.memory_space<vmem>>, %arg3: memref<128x128xbf16, #tpu.memory_space<vmem>>, %arg4: memref<1x128xf32, #tpu.memory_space<vmem>>, %arg5: memref<128x128xbf16, #tpu.memory_space<vmem>>, %arg6: memref<128x128xbf16, #tpu.memory_space<vmem>>, %arg7: memref<1x128xf32, #tpu.memory_space<vmem>>, %arg8: memref<128x128xbf16, #tpu.memory_space<vmem>>, %arg9: memref<128x128xbf16, #tpu.memory_space<vmem>>, %arg10: memref<1x128xf32, #tpu.memory_space<vmem>>, %arg11: memref<384x128xbf16, #tpu.memory_space<vmem>>, %arg12: memref<2x128x128xf32, #tpu.memory_space<vmem>>) attributes {dimension_semantics = [#tpu.dimension_semantics<parallel>], iteration_bounds = array<i64: 2>, scalar_prefetch = 0 : i64, scratch_operands = 0 : i64, tpu.core_type = #tpu.core_type<tc>, window_params = [{transform_indices = @transform_0, window_bounds = array<i64: 2, 128, 128>}, {transform_indices = @transform_1, window_bounds = array<i64: 2, 128, 128>}, {pipeline_mode = #tpu.pipeline_mode<synchronous>, transform_indices = @transform_2, window_bounds = array<i64: 128, 128>}, {pipeline_mode = #tpu.pipeline_mode<synchronous>, transform_indices = @transform_3, window_bounds = array<i64: 1, 128>}, {pipeline_mode = #tpu.pipeline_mode<synchronous>, transform_indices = @transform_4, window_bounds = array<i64: 128, 128>}, {pipeline_mode = #tpu.pipeline_mode<synchronous>, transform_indices = @transform_5, window_bounds = array<i64: 128, 128>}, {pipeline_mode = #tpu.pipeline_mode<synchronous>, transform_indices = @transform_6, window_bounds = array<i64: 1, 128>}, {pipeline_mode = #tpu.pipeline_mode<synchronous>, transform_indices = @transform_7, window_bounds = array<i64: 128, 128>}, {pipeline_mode = #tpu.pipeline_mode<synchronous>, transform_indices = @transform_8, window_bounds = array<i64: 128, 128>}, {pipeline_mode = #tpu.pipeline_mode<synchronous>, transform_indices = @transform_9, window_bounds = array<i64: 1, 128>}, {pipeline_mode = #tpu.pipeline_mode<synchronous>, transform_indices = @transform_10, window_bounds = array<i64: 384, 128>}, {transform_indices = @transform_11, window_bounds = array<i64: 2, 128, 128>}]} {
    %c0 = arith.constant 0 : index
    %c0_0 = arith.constant 0 : index
    %c0_1 = arith.constant 0 : index
    %0 = vector.load %arg1[%c0, %c0_0, %c0_1] : memref<2x128x128xbf16, #tpu.memory_space<vmem>>, vector<2x128x128xbf16>
    %1 = vector.shape_cast %0 : vector<2x128x128xbf16> to vector<256x128xbf16>
    %c0_2 = arith.constant 0 : index
    %c0_3 = arith.constant 0 : index
    %c0_4 = arith.constant 0 : index
    %2 = vector.load %arg2[%c0_2, %c0_3, %c0_4] : memref<2x128x128xbf16, #tpu.memory_space<vmem>>, vector<2x128x128xbf16>
    %c0_5 = arith.constant 0 : index
    %c0_6 = arith.constant 0 : index
    %3 = vector.load %arg3[%c0_5, %c0_6] : memref<128x128xbf16, #tpu.memory_space<vmem>>, vector<128x128xbf16>
    %cst = arith.constant dense<0.000000e+00> : vector<256x128xf32>
    %4 = tpu.matmul %1, %3, %cst {dimension_numbers = #tpu.dot_dimension_numbers<[1], [0], [0], [1], [0, 0, 1, 1], [], []>} : vector<256x128xbf16>, vector<128x128xbf16>, vector<256x128xf32> -> vector<256x128xf32>
    %c0_7 = arith.constant 0 : index
    %c0_8 = arith.constant 0 : index
    %5 = vector.load %arg4[%c0_7, %c0_8] : memref<1x128xf32, #tpu.memory_space<vmem>>, vector<1x128xf32>
    %6 = vector.broadcast %5 : vector<1x128xf32> to vector<256x128xf32>
    %7 = arith.addf %4, %6 : vector<256x128xf32>
    %cst_9 = arith.constant 0.00999999977 : f32
    %8 = vector.broadcast %cst_9 : f32 to vector<256x128xf32>
    %9 = arith.mulf %8, %7 : vector<256x128xf32>
    %10 = arith.maximumf %7, %9 : vector<256x128xf32>
    %11 = arith.truncf %10 : vector<256x128xf32> to vector<256x128xbf16>
    %12 = vector.shape_cast %11 : vector<256x128xbf16> to vector<2x128x128xbf16>
    "tpu.trace_start"() <{level = 10 : i32, message = "gij,gjd->gid"}> : () -> ()
    %cst_10 = arith.constant dense<0.000000e+00> : vector<2x128x128xf32>
    %13 = tpu.matmul %2, %12, %cst_10 {dimension_numbers = #tpu.dot_dimension_numbers<[2], [1], [1], [2], [0, 0, 0, 1, 1, 2], [0], [0]>} : vector<2x128x128xbf16>, vector<2x128x128xbf16>, vector<2x128x128xf32> -> vector<2x128x128xf32>
    "tpu.trace_stop"() : () -> ()
    %14 = vector.shape_cast %13 : vector<2x128x128xf32> to vector<256x128xf32>
    %15 = arith.truncf %14 : vector<256x128xf32> to vector<256x128xbf16>
    %c0_11 = arith.constant 0 : index
    %c0_12 = arith.constant 0 : index
    %16 = vector.load %arg8[%c0_11, %c0_12] : memref<128x128xbf16, #tpu.memory_space<vmem>>, vector<128x128xbf16>
    %cst_13 = arith.constant dense<0.000000e+00> : vector<256x128xf32>
    %17 = tpu.matmul %11, %16, %cst_13 {dimension_numbers = #tpu.dot_dimension_numbers<[1], [0], [0], [1], [0, 0, 1, 1], [], []>} : vector<256x128xbf16>, vector<128x128xbf16>, vector<256x128xf32> -> vector<256x128xf32>
    %c0_14 = arith.constant 0 : index
    %c0_15 = arith.constant 0 : index
    %18 = vector.load %arg9[%c0_14, %c0_15] : memref<128x128xbf16, #tpu.memory_space<vmem>>, vector<128x128xbf16>
    %cst_16 = arith.constant dense<0.000000e+00> : vector<256x128xf32>
    %19 = tpu.matmul %15, %18, %cst_16 {dimension_numbers = #tpu.dot_dimension_numbers<[1], [0], [0], [1], [0, 0, 1, 1], [], []>} : vector<256x128xbf16>, vector<128x128xbf16>, vector<256x128xf32> -> vector<256x128xf32>
    %20 = arith.addf %17, %19 : vector<256x128xf32>
    %c0_17 = arith.constant 0 : index
    %c0_18 = arith.constant 0 : index
    %21 = vector.load %arg10[%c0_17, %c0_18] : memref<1x128xf32, #tpu.memory_space<vmem>>, vector<1x128xf32>
    %22 = vector.broadcast %21 : vector<1x128xf32> to vector<256x128xf32>
    %23 = arith.addf %20, %22 : vector<256x128xf32>
    %c0_19 = arith.constant 0 : index
    %c0_20 = arith.constant 0 : index
    %24 = vector.load %arg5[%c0_19, %c0_20] : memref<128x128xbf16, #tpu.memory_space<vmem>>, vector<128x128xbf16>
    %cst_21 = arith.constant dense<0.000000e+00> : vector<256x128xf32>
    %25 = tpu.matmul %11, %24, %cst_21 {dimension_numbers = #tpu.dot_dimension_numbers<[1], [0], [0], [1], [0, 0, 1, 1], [], []>} : vector<256x128xbf16>, vector<128x128xbf16>, vector<256x128xf32> -> vector<256x128xf32>
    %c0_22 = arith.constant 0 : index
    %c0_23 = arith.constant 0 : index
    %26 = vector.load %arg6[%c0_22, %c0_23] : memref<128x128xbf16, #tpu.memory_space<vmem>>, vector<128x128xbf16>
    %cst_24 = arith.constant dense<0.000000e+00> : vector<256x128xf32>
    %27 = tpu.matmul %15, %26, %cst_24 {dimension_numbers = #tpu.dot_dimension_numbers<[1], [0], [0], [1], [0, 0, 1, 1], [], []>} : vector<256x128xbf16>, vector<128x128xbf16>, vector<256x128xf32> -> vector<256x128xf32>
    %28 = arith.addf %25, %27 : vector<256x128xf32>
    %c0_25 = arith.constant 0 : index
    %c0_26 = arith.constant 0 : index
    %29 = vector.load %arg7[%c0_25, %c0_26] : memref<1x128xf32, #tpu.memory_space<vmem>>, vector<1x128xf32>
    %30 = vector.broadcast %29 : vector<1x128xf32> to vector<256x128xf32>
    %31 = arith.addf %28, %30 : vector<256x128xf32>
    %cst_27 = arith.constant 0.00999999977 : f32
    %32 = vector.broadcast %cst_27 : f32 to vector<256x128xf32>
    %33 = arith.mulf %32, %31 : vector<256x128xf32>
    %34 = arith.maximumf %31, %33 : vector<256x128xf32>
    %35 = arith.truncf %34 : vector<256x128xf32> to vector<256x128xbf16>
    %36 = vector.shape_cast %35 : vector<256x128xbf16> to vector<2x128x128xbf16>
    "tpu.trace_start"() <{level = 10 : i32, message = "gij,gjd->gid"}> : () -> ()
    %cst_28 = arith.constant dense<0.000000e+00> : vector<2x128x128xf32>
    %37 = tpu.matmul %2, %36, %cst_28 {dimension_numbers = #tpu.dot_dimension_numbers<[2], [1], [1], [2], [0, 0, 0, 1, 1, 2], [0], [0]>} : vector<2x128x128xbf16>, vector<2x128x128xbf16>, vector<2x128x128xf32> -> vector<2x128x128xf32>
    "tpu.trace_stop"() : () -> ()
    %38 = vector.shape_cast %37 : vector<2x128x128xf32> to vector<256x128xf32>
    %39 = arith.truncf %38 : vector<256x128xf32> to vector<256x128xbf16>
    %c0_29 = arith.constant 0 : index
    %c0_30 = arith.constant 0 : index
    %40 = vector.load %arg8[%c0_29, %c0_30] : memref<128x128xbf16, #tpu.memory_space<vmem>>, vector<128x128xbf16>
    %cst_31 = arith.constant dense<0.000000e+00> : vector<256x128xf32>
    %41 = tpu.matmul %35, %40, %cst_31 {dimension_numbers = #tpu.dot_dimension_numbers<[1], [0], [0], [1], [0, 0, 1, 1], [], []>} : vector<256x128xbf16>, vector<128x128xbf16>, vector<256x128xf32> -> vector<256x128xf32>
    %c0_32 = arith.constant 0 : index
    %c0_33 = arith.constant 0 : index
    %42 = vector.load %arg9[%c0_32, %c0_33] : memref<128x128xbf16, #tpu.memory_space<vmem>>, vector<128x128xbf16>
    %cst_34 = arith.constant dense<0.000000e+00> : vector<256x128xf32>
    %43 = tpu.matmul %39, %42, %cst_34 {dimension_numbers = #tpu.dot_dimension_numbers<[1], [0], [0], [1], [0, 0, 1, 1], [], []>} : vector<256x128xbf16>, vector<128x128xbf16>, vector<256x128xf32> -> vector<256x128xf32>
    %44 = arith.addf %41, %43 : vector<256x128xf32>
    %c0_35 = arith.constant 0 : index
    %c0_36 = arith.constant 0 : index
    %45 = vector.load %arg10[%c0_35, %c0_36] : memref<1x128xf32, #tpu.memory_space<vmem>>, vector<1x128xf32>
    %46 = vector.broadcast %45 : vector<1x128xf32> to vector<256x128xf32>
    %47 = arith.addf %44, %46 : vector<256x128xf32>
    %48 = arith.truncf %7 : vector<256x128xf32> to vector<256x128xbf16>
    %c0_37 = arith.constant 0 : index
    %c0_38 = arith.constant 0 : index
    %49 = vector.load %arg11[%c0_37, %c0_38] : memref<384x128xbf16, #tpu.memory_space<vmem>>, vector<128x128xbf16>
    %cst_39 = arith.constant dense<0.000000e+00> : vector<256x128xf32>
    %50 = tpu.matmul %48, %49, %cst_39 {dimension_numbers = #tpu.dot_dimension_numbers<[1], [0], [0], [1], [0, 0, 1, 1], [], []>} : vector<256x128xbf16>, vector<128x128xbf16>, vector<256x128xf32> -> vector<256x128xf32>
    %51 = arith.truncf %23 : vector<256x128xf32> to vector<256x128xbf16>
    %c128 = arith.constant 128 : index
    %c0_40 = arith.constant 0 : index
    %52 = vector.load %arg11[%c128, %c0_40] : memref<384x128xbf16, #tpu.memory_space<vmem>>, vector<128x128xbf16>
    %cst_41 = arith.constant dense<0.000000e+00> : vector<256x128xf32>
    %53 = tpu.matmul %51, %52, %cst_41 {dimension_numbers = #tpu.dot_dimension_numbers<[1], [0], [0], [1], [0, 0, 1, 1], [], []>} : vector<256x128xbf16>, vector<128x128xbf16>, vector<256x128xf32> -> vector<256x128xf32>
    %54 = arith.addf %50, %53 : vector<256x128xf32>
    %55 = arith.truncf %47 : vector<256x128xf32> to vector<256x128xbf16>
    %c256 = arith.constant 256 : index
    %c0_42 = arith.constant 0 : index
    %56 = vector.load %arg11[%c256, %c0_42] : memref<384x128xbf16, #tpu.memory_space<vmem>>, vector<128x128xbf16>
    %cst_43 = arith.constant dense<0.000000e+00> : vector<256x128xf32>
    %57 = tpu.matmul %55, %56, %cst_43 {dimension_numbers = #tpu.dot_dimension_numbers<[1], [0], [0], [1], [0, 0, 1, 1], [], []>} : vector<256x128xbf16>, vector<128x128xbf16>, vector<256x128xf32> -> vector<256x128xf32>
    %58 = arith.addf %54, %57 : vector<256x128xf32>
    %59 = vector.shape_cast %58 : vector<256x128xf32> to vector<2x128x128xf32>
    %c0_44 = arith.constant 0 : index
    %c0_45 = arith.constant 0 : index
    %c0_46 = arith.constant 0 : index
    %60 = vector.load %arg12[%c0_44, %c0_45, %c0_46] : memref<2x128x128xf32, #tpu.memory_space<vmem>>, vector<2x128x128xf32>
    tpu.vector_store %arg12[%c0_44, %c0_45, %c0_46], %59 {strides = array<i32>} : memref<2x128x128xf32, #tpu.memory_space<vmem>>, vector<2x128x128xf32>,
    return
  }
  func.func @transform_0(%arg0: i32) -> (i32, i32, i32) {
    %c0_i32 = arith.constant 0 : i32
    %c0_i32_0 = arith.constant 0 : i32
    %c0_i32_1 = arith.constant 0 : i32
    return %arg0, %c0_i32, %c0_i32_0 : i32, i32, i32
  }
  func.func @transform_1(%arg0: i32) -> (i32, i32, i32) {
    %c0_i32 = arith.constant 0 : i32
    %c0_i32_0 = arith.constant 0 : i32
    %c0_i32_1 = arith.constant 0 : i32
    return %arg0, %c0_i32, %c0_i32_0 : i32, i32, i32
  }
  func.func @transform_2(%arg0: i32) -> (i32, i32) {
    %c0_i32 = arith.constant 0 : i32
    %c0_i32_0 = arith.constant 0 : i32
    %c0_i32_1 = arith.constant 0 : i32
    return %c0_i32, %c0_i32_0 : i32, i32
  }
  func.func @transform_3(%arg0: i32) -> (i32, i32) {
    %c0_i32 = arith.constant 0 : i32
    %c0_i32_0 = arith.constant 0 : i32
    %c0_i32_1 = arith.constant 0 : i32
    return %c0_i32, %c0_i32_0 : i32, i32
  }
  func.func @transform_4(%arg0: i32) -> (i32, i32) {
    %c0_i32 = arith.constant 0 : i32
    %c0_i32_0 = arith.constant 0 : i32
    %c0_i32_1 = arith.constant 0 : i32
    return %c0_i32, %c0_i32_0 : i32, i32
  }
  func.func @transform_5(%arg0: i32) -> (i32, i32) {
    %c0_i32 = arith.constant 0 : i32
    %c0_i32_0 = arith.constant 0 : i32
    %c0_i32_1 = arith.constant 0 : i32
    return %c0_i32, %c0_i32_0 : i32, i32
  }
  func.func @transform_6(%arg0: i32) -> (i32, i32) {
    %c0_i32 = arith.constant 0 : i32
    %c0_i32_0 = arith.constant 0 : i32
    %c0_i32_1 = arith.constant 0 : i32
    return %c0_i32, %c0_i32_0 : i32, i32
  }
  func.func @transform_7(%arg0: i32) -> (i32, i32) {
    %c0_i32 = arith.constant 0 : i32
    %c0_i32_0 = arith.constant 0 : i32
    %c0_i32_1 = arith.constant 0 : i32
    return %c0_i32, %c0_i32_0 : i32, i32
  }
  func.func @transform_8(%arg0: i32) -> (i32, i32) {
    %c0_i32 = arith.constant 0 : i32
    %c0_i32_0 = arith.constant 0 : i32
    %c0_i32_1 = arith.constant 0 : i32
    return %c0_i32, %c0_i32_0 : i32, i32
  }
  func.func @transform_9(%arg0: i32) -> (i32, i32) {
    %c0_i32 = arith.constant 0 : i32
    %c0_i32_0 = arith.constant 0 : i32
    %c0_i32_1 = arith.constant 0 : i32
    return %c0_i32, %c0_i32_0 : i32, i32
  }
  func.func @transform_10(%arg0: i32) -> (i32, i32) {
    %c0_i32 = arith.constant 0 : i32
    %c0_i32_0 = arith.constant 0 : i32
    %c0_i32_1 = arith.constant 0 : i32
    return %c0_i32, %c0_i32_0 : i32, i32
  }
  func.func @transform_11(%arg0: i32) -> (i32, i32, i32) {
    %c0_i32 = arith.constant 0 : i32
    %c0_i32_0 = arith.constant 0 : i32
    %c0_i32_1 = arith.constant 0 : i32
    return %arg0, %c0_i32, %c0_i32_0 : i32, i32, i32
  }
}

</mosaic_0001>

<llo_original>
// kernel: _lambda_.1
$region0: #{_lambda_.1}
  #allocation0 [shape = 'u32[]', space=smem, size = 0x4, offset = 0x4, fixed_abs, tag = 'smem constant byte address 0x4 - core index']
  #allocation1 [shape = 'u32[72,128]{1,0:T(1,128)}', space=vmem, size = 0x9000, scoped, tag = 'internal scratch']
  %s0 = inlined_call_operand.vmem [shape: bf16[4,128,128], index: 0, kind: input, shape index: {}]
  %s1 = inlined_call_operand.vmem [shape: bf16[4,128,128], index: 1, kind: input, shape index: {}]
  %s2 = inlined_call_operand.vmem [shape: bf16[128,128], index: 2, kind: input, shape index: {}]
  %s3 = inlined_call_operand.vmem [shape: f32[1,128], index: 3, kind: input, shape index: {}]
  %s4 = inlined_call_operand.vmem [shape: bf16[128,128], index: 4, kind: input, shape index: {}]
  %s5 = inlined_call_operand.vmem [shape: bf16[128,128], index: 5, kind: input, shape index: {}]
  %s6 = inlined_call_operand.vmem [shape: f32[1,128], index: 6, kind: input, shape index: {}]
  %s7 = inlined_call_operand.vmem [shape: bf16[128,128], index: 7, kind: input, shape index: {}]
  %s8 = inlined_call_operand.vmem [shape: bf16[128,128], index: 8, kind: input, shape index: {}]
  %s9 = inlined_call_operand.vmem [shape: f32[1,128], index: 9, kind: input, shape index: {}]
  %s10 = inlined_call_operand.vmem [shape: bf16[384,128], index: 10, kind: input, shape index: {}]
  %s11 = inlined_call_operand.hbm [shape: f32[4,128,128], index: 11, kind: output, shape index: {}]
  %s12 = sld [smem:[#allocation0]]
  $region77: #{_lambda_.1} parent=0
    _
  %s14 = ssub.s32 1, %s12
  %s15 = scalar_select 0, %s14, %s12
  $region1: #{_lambda_.1} parent=0
    #allocation2 [shape = 'u8[262144]{0}', space=vmem, size = 0x40000, scoped, tag = 'output window, operand 0']
    #allocation3 [shape = 's32[2]{0}', space=sflag, size = 0x8, scoped, tag = 'scoped memory for _lambda_.1']
    %16 = vsyncpa [#allocation3], 0
    %s17 = scalar_lea.sflag [#allocation3], 1
    %18 = vsyncpa %s17, 0
    loop: start=0, step=1, limit=4
    $region2: #{_lambda_.1} parent=1 // loop_pre_header
      _
    $region3: #{_lambda_.1} parent=1 // loop_header
      %s20 = sphi 0, %s24
      %p21 = scmp.ge.s32.totalorder %s20, 4
      %s30 = sphi 0, %s32
      %s33 = sphi 0, %s30
      %s34 = sphi 0, %s33
      %s50 = sphi 0, %s34
      %s56 = sphi 0, %s58
      %s59 = sphi 0, %s56
      %s60 = sphi 0, %s59
      %s76 = sphi 0, %s60
      %s80 = sphi 0, %s80
      %s82 = sphi 0, %s80
      %s83 = sphi 0, %s82
      %s97 = sphi 0, %s83
      %s101 = sphi 0, %s101
      %s103 = sphi 0, %s101
      %s104 = sphi 0, %s103
      %s118 = sphi 0, %s104
      %s122 = sphi 0, %s122
      %s124 = sphi 0, %s122
      %s125 = sphi 0, %s124
      %s139 = sphi 0, %s125
      %s143 = sphi 0, %s143
      %s145 = sphi 0, %s143
      %s146 = sphi 0, %s145
      %s160 = sphi 0, %s146
      %s164 = sphi 0, %s164
      %s166 = sphi 0, %s164
      %s167 = sphi 0, %s166
      %s181 = sphi 0, %s167
      %s185 = sphi 0, %s185
      %s187 = sphi 0, %s185
      %s188 = sphi 0, %s187
      %s202 = sphi 0, %s188
      %s206 = sphi 0, %s206
      %s208 = sphi 0, %s206
      %s209 = sphi 0, %s208
      %s223 = sphi 0, %s209
      %s227 = sphi 0, %s227
      %s229 = sphi 0, %s227
      %s230 = sphi 0, %s229
      %s244 = sphi 0, %s230
      %s248 = sphi 0, %s248
      %s250 = sphi 0, %s248
      %s251 = sphi 0, %s250
      %s265 = sphi 0, %s251
      %s271 = sphi 0, %s273
      %s274 = sphi 0, %s271
      %s275 = sphi 0, %s274
      %s291 = sphi 0, %s275
    $region4: #{_lambda_.1} parent=1 // loop_header_branch
      %23 = sbr.rel (%p21) target = $region8
    $region5: #{_lambda_.1} parent=1 // loop_body
      %s25 = ssub.s32 %s20, 1
      %s26 = ssub.s32 %s20, 2
      %s27 = sadd.s32 %s20, 1
      %s28 = ssub.s32 %s20, %s27
      %p29 = scmp.eq.s32.totalorder %s28, 0
      %s31 = sadd.s32 %s30, 1
      %s32 = scalar_select %p29, %s30, %s31
      %p35 = pneg %p29
      %p36 = scmp.eq.s32.totalorder %s20, 1
      %p37 = por %p35, %p36
      %p38 = scmp.ne.s32.totalorder %s30, %s33
      %p39 = scmp.eq.s32.totalorder %s20, 0
      %p40 = por %p38, %p39
      %p41 = scmp.ne.s32.totalorder %s30, %s33
      %p42 = scmp.eq.s32.totalorder %s25, 1
      %p43 = por %p41, %p42
      %p44 = scmp.ne.s32.totalorder %s33, %s34
      %p45 = scmp.eq.s32.totalorder %s25, 0
      %p46 = por %p44, %p45
      %p47 = scmp.ne.s32.totalorder %s33, %s34
      %p48 = scmp.eq.s32.totalorder %s26, 1
      %p49 = por %p47, %p48
      %p51 = scmp.ne.s32.totalorder %s34, %s50
      %p52 = scmp.eq.s32.totalorder %s26, 0
      %p53 = por %p51, %p52
      %s54 = ssub.s32 %s20, %s27
      %p55 = scmp.eq.s32.totalorder %s54, 0
      %s57 = sadd.s32 %s56, 1
      %s58 = scalar_select %p55, %s56, %s57
      %p61 = pneg %p55
      %p62 = scmp.eq.s32.totalorder %s20, 1
      %p63 = por %p61, %p62
      %p64 = scmp.ne.s32.totalorder %s56, %s59
      %p65 = scmp.eq.s32.totalorder %s20, 0
      %p66 = por %p64, %p65
      %p67 = scmp.ne.s32.totalorder %s56, %s59
      %p68 = scmp.eq.s32.totalorder %s25, 1
      %p69 = por %p67, %p68
      %p70 = scmp.ne.s32.totalorder %s59, %s60
      %p71 = scmp.eq.s32.totalorder %s25, 0
      %p72 = por %p70, %p71
      %p73 = scmp.ne.s32.totalorder %s59, %s60
      %p74 = scmp.eq.s32.totalorder %s26, 1
      %p75 = por %p73, %p74
      %p77 = scmp.ne.s32.totalorder %s60, %s76
      %p78 = scmp.eq.s32.totalorder %s26, 0
      %p79 = por %p77, %p78
      %s81 = sadd.s32 %s80, 1
      %p84 = scmp.eq.s32.totalorder %s20, 1
      %p85 = scmp.ne.s32.totalorder %s80, %s82
      %p86 = scmp.eq.s32.totalorder %s20, 0
      %p87 = por %p85, %p86
      %p88 = scmp.ne.s32.totalorder %s80, %s82
      %p89 = scmp.eq.s32.totalorder %s25, 1
      %p90 = por %p88, %p89
      %p91 = scmp.ne.s32.totalorder %s82, %s83
      %p92 = scmp.eq.s32.totalorder %s25, 0
      %p93 = por %p91, %p92
      %p94 = scmp.ne.s32.totalorder %s82, %s83
      %p95 = scmp.eq.s32.totalorder %s26, 1
      %p96 = por %p94, %p95
      %p98 = scmp.ne.s32.totalorder %s83, %s97
      %p99 = scmp.eq.s32.totalorder %s26, 0
      %p100 = por %p98, %p99
      %s102 = sadd.s32 %s101, 1
      %p105 = scmp.eq.s32.totalorder %s20, 1
      %p106 = scmp.ne.s32.totalorder %s101, %s103
      %p107 = scmp.eq.s32.totalorder %s20, 0
      %p108 = por %p106, %p107
      %p109 = scmp.ne.s32.totalorder %s101, %s103
      %p110 = scmp.eq.s32.totalorder %s25, 1
      %p111 = por %p109, %p110
      %p112 = scmp.ne.s32.totalorder %s103, %s104
      %p113 = scmp.eq.s32.totalorder %s25, 0
      %p114 = por %p112, %p113
      %p115 = scmp.ne.s32.totalorder %s103, %s104
      %p116 = scmp.eq.s32.totalorder %s26, 1
      %p117 = por %p115, %p116
      %p119 = scmp.ne.s32.totalorder %s104, %s118
      %p120 = scmp.eq.s32.totalorder %s26, 0
      %p121 = por %p119, %p120
      %s123 = sadd.s32 %s122, 1
      %p126 = scmp.eq.s32.totalorder %s20, 1
      %p127 = scmp.ne.s32.totalorder %s122, %s124
      %p128 = scmp.eq.s32.totalorder %s20, 0
      %p129 = por %p127, %p128
      %p130 = scmp.ne.s32.totalorder %s122, %s124
      %p131 = scmp.eq.s32.totalorder %s25, 1
      %p132 = por %p130, %p131
      %p133 = scmp.ne.s32.totalorder %s124, %s125
      %p134 = scmp.eq.s32.totalorder %s25, 0
      %p135 = por %p133, %p134
      %p136 = scmp.ne.s32.totalorder %s124, %s125
      %p137 = scmp.eq.s32.totalorder %s26, 1
      %p138 = por %p136, %p137
      %p140 = scmp.ne.s32.totalorder %s125, %s139
      %p141 = scmp.eq.s32.totalorder %s26, 0
      %p142 = por %p140, %p141
      %s144 = sadd.s32 %s143, 1
      %p147 = scmp.eq.s32.totalorder %s20, 1
      %p148 = scmp.ne.s32.totalorder %s143, %s145
      %p149 = scmp.eq.s32.totalorder %s20, 0
      %p150 = por %p148, %p149
      %p151 = scmp.ne.s32.totalorder %s143, %s145
      %p152 = scmp.eq.s32.totalorder %s25, 1
      %p153 = por %p151, %p152
      %p154 = scmp.ne.s32.totalorder %s145, %s146
      %p155 = scmp.eq.s32.totalorder %s25, 0
      %p156 = por %p154, %p155
      %p157 = scmp.ne.s32.totalorder %s145, %s146
      %p158 = scmp.eq.s32.totalorder %s26, 1
      %p159 = por %p157, %p158
      %p161 = scmp.ne.s32.totalorder %s146, %s160
      %p162 = scmp.eq.s32.totalorder %s26, 0
      %p163 = por %p161, %p162
      %s165 = sadd.s32 %s164, 1
      %p168 = scmp.eq.s32.totalorder %s20, 1
      %p169 = scmp.ne.s32.totalorder %s164, %s166
      %p170 = scmp.eq.s32.totalorder %s20, 0
      %p171 = por %p169, %p170
      %p172 = scmp.ne.s32.totalorder %s164, %s166
      %p173 = scmp.eq.s32.totalorder %s25, 1
      %p174 = por %p172, %p173
      %p175 = scmp.ne.s32.totalorder %s166, %s167
      %p176 = scmp.eq.s32.totalorder %s25, 0
      %p177 = por %p175, %p176
      %p178 = scmp.ne.s32.totalorder %s166, %s167
      %p179 = scmp.eq.s32.totalorder %s26, 1
      %p180 = por %p178, %p179
      %p182 = scmp.ne.s32.totalorder %s167, %s181
      %p183 = scmp.eq.s32.totalorder %s26, 0
      %p184 = por %p182, %p183
      %s186 = sadd.s32 %s185, 1
      %p189 = scmp.eq.s32.totalorder %s20, 1
      %p190 = scmp.ne.s32.totalorder %s185, %s187
      %p191 = scmp.eq.s32.totalorder %s20, 0
      %p192 = por %p190, %p191
      %p193 = scmp.ne.s32.totalorder %s185, %s187
      %p194 = scmp.eq.s32.totalorder %s25, 1
      %p195 = por %p193, %p194
      %p196 = scmp.ne.s32.totalorder %s187, %s188
      %p197 = scmp.eq.s32.totalorder %s25, 0
      %p198 = por %p196, %p197
      %p199 = scmp.ne.s32.totalorder %s187, %s188
      %p200 = scmp.eq.s32.totalorder %s26, 1
      %p201 = por %p199, %p200
      %p203 = scmp.ne.s32.totalorder %s188, %s202
      %p204 = scmp.eq.s32.totalorder %s26, 0
      %p205 = por %p203, %p204
      %s207 = sadd.s32 %s206, 1
      %p210 = scmp.eq.s32.totalorder %s20, 1
      %p211 = scmp.ne.s32.totalorder %s206, %s208
      %p212 = scmp.eq.s32.totalorder %s20, 0
      %p213 = por %p211, %p212
      %p214 = scmp.ne.s32.totalorder %s206, %s208
      %p215 = scmp.eq.s32.totalorder %s25, 1
      %p216 = por %p214, %p215
      %p217 = scmp.ne.s32.totalorder %s208, %s209
      %p218 = scmp.eq.s32.totalorder %s25, 0
      %p219 = por %p217, %p218
      %p220 = scmp.ne.s32.totalorder %s208, %s209
      %p221 = scmp.eq.s32.totalorder %s26, 1
      %p222 = por %p220, %p221
      %p224 = scmp.ne.s32.totalorder %s209, %s223
      %p225 = scmp.eq.s32.totalorder %s26, 0
      %p226 = por %p224, %p225
      %s228 = sadd.s32 %s227, 1
      %p231 = scmp.eq.s32.totalorder %s20, 1
      %p232 = scmp.ne.s32.totalorder %s227, %s229
      %p233 = scmp.eq.s32.totalorder %s20, 0
      %p234 = por %p232, %p233
      %p235 = scmp.ne.s32.totalorder %s227, %s229
      %p236 = scmp.eq.s32.totalorder %s25, 1
      %p237 = por %p235, %p236
      %p238 = scmp.ne.s32.totalorder %s229, %s230
      %p239 = scmp.eq.s32.totalorder %s25, 0
      %p240 = por %p238, %p239
      %p241 = scmp.ne.s32.totalorder %s229, %s230
      %p242 = scmp.eq.s32.totalorder %s26, 1
      %p243 = por %p241, %p242
      %p245 = scmp.ne.s32.totalorder %s230, %s244
      %p246 = scmp.eq.s32.totalorder %s26, 0
      %p247 = por %p245, %p246
      %s249 = sadd.s32 %s248, 1
      %p252 = scmp.eq.s32.totalorder %s20, 1
      %p253 = scmp.ne.s32.totalorder %s248, %s250
      %p254 = scmp.eq.s32.totalorder %s20, 0
      %p255 = por %p253, %p254
      %p256 = scmp.ne.s32.totalorder %s248, %s250
      %p257 = scmp.eq.s32.totalorder %s25, 1
      %p258 = por %p256, %p257
      %p259 = scmp.ne.s32.totalorder %s250, %s251
      %p260 = scmp.eq.s32.totalorder %s25, 0
      %p261 = por %p259, %p260
      %p262 = scmp.ne.s32.totalorder %s250, %s251
      %p263 = scmp.eq.s32.totalorder %s26, 1
      %p264 = por %p262, %p263
      %p266 = scmp.ne.s32.totalorder %s251, %s265
      %p267 = scmp.eq.s32.totalorder %s26, 0
      %p268 = por %p266, %p267
      %s269 = ssub.s32 %s20, %s27
      %p270 = scmp.eq.s32.totalorder %s269, 0
      %s272 = sadd.s32 %s271, 1
      %s273 = scalar_select %p270, %s271, %s272
      %p276 = pneg %p270
      %p277 = scmp.eq.s32.totalorder %s20, 1
      %p278 = por %p276, %p277
      %p279 = scmp.ne.s32.totalorder %s271, %s274
      %p280 = scmp.eq.s32.totalorder %s20, 0
      %p281 = por %p279, %p280
      %p282 = scmp.ne.s32.totalorder %s271, %s274
      %p283 = scmp.eq.s32.totalorder %s25, 1
      %p284 = por %p282, %p283
      %p285 = scmp.ne.s32.totalorder %s274, %s275
      %p286 = scmp.eq.s32.totalorder %s25, 0
      %p287 = por %p285, %p286
      %p288 = scmp.ne.s32.totalorder %s274, %s275
      %p289 = scmp.eq.s32.totalorder %s26, 1
      %p290 = por %p288, %p289
      %p292 = scmp.ne.s32.totalorder %s275, %s291
      %p293 = scmp.eq.s32.totalorder %s26, 0
      %p294 = por %p292, %p293
      %p295 = scmp.le.s32.totalorder 1, %s20
      %p296 = scmp.lt.s32.totalorder %s20, 3
      %p297 = pnand %p295, %p296
      %p298 = pneg %p297
      // Predicated region
      $region9: #{_lambda_.1} parent=5 // pred_check
        _
      $region10: #{_lambda_.1} parent=5 // pred_check_branch
        %300 = sbr.rel (%p297) target = $region12
      $region11: #{_lambda_.1} parent=5 // pred_region
        %s301 = ssub.s32 %s20, 1
        // Predicated region
        $region13: #{_lambda_.1} parent=11 // pred_check
          %p302 = pneg %p93
        $region14: #{_lambda_.1} parent=11 // pred_check_branch
          %304 = sbr.rel (%p302) target = $region16
        $region15: #{_lambda_.1} parent=11 // pred_region
          _
        $region16: #{_lambda_.1} parent=11 // pred_fallthru
          _
        // Predicated region
        $region17: #{_lambda_.1} parent=11 // pred_check
          %p305 = pneg %p114
        $region18: #{_lambda_.1} parent=11 // pred_check_branch
          %307 = sbr.rel (%p305) target = $region20
        $region19: #{_lambda_.1} parent=11 // pred_region
          _
        $region20: #{_lambda_.1} parent=11 // pred_fallthru
          _
        // Predicated region
        $region21: #{_lambda_.1} parent=11 // pred_check
          %p308 = pneg %p135
        $region22: #{_lambda_.1} parent=11 // pred_check_branch
          %310 = sbr.rel (%p308) target = $region24
        $region23: #{_lambda_.1} parent=11 // pred_region
          _
        $region24: #{_lambda_.1} parent=11 // pred_fallthru
          _
        // Predicated region
        $region25: #{_lambda_.1} parent=11 // pred_check
          %p311 = pneg %p156
        $region26: #{_lambda_.1} parent=11 // pred_check_branch
          %313 = sbr.rel (%p311) target = $region28
        $region27: #{_lambda_.1} parent=11 // pred_region
          _
        $region28: #{_lambda_.1} parent=11 // pred_fallthru
          _
        // Predicated region
        $region29: #{_lambda_.1} parent=11 // pred_check
          %p314 = pneg %p177
        $region30: #{_lambda_.1} parent=11 // pred_check_branch
          %316 = sbr.rel (%p314) target = $region32
        $region31: #{_lambda_.1} parent=11 // pred_region
          _
        $region32: #{_lambda_.1} parent=11 // pred_fallthru
          _
        // Predicated region
        $region33: #{_lambda_.1} parent=11 // pred_check
          %p317 = pneg %p198
        $region34: #{_lambda_.1} parent=11 // pred_check_branch
          %319 = sbr.rel (%p317) target = $region36
        $region35: #{_lambda_.1} parent=11 // pred_region
          _
        $region36: #{_lambda_.1} parent=11 // pred_fallthru
          _
        // Predicated region
        $region37: #{_lambda_.1} parent=11 // pred_check
          %p320 = pneg %p219
        $region38: #{_lambda_.1} parent=11 // pred_check_branch
          %322 = sbr.rel (%p320) target = $region40
        $region39: #{_lambda_.1} parent=11 // pred_region
          _
        $region40: #{_lambda_.1} parent=11 // pred_fallthru
          _
        // Predicated region
        $region41: #{_lambda_.1} parent=11 // pred_check
          %p323 = pneg %p240
        $region42: #{_lambda_.1} parent=11 // pred_check_branch
          %325 = sbr.rel (%p323) target = $region44
        $region43: #{_lambda_.1} parent=11 // pred_region
          _
        $region44: #{_lambda_.1} parent=11 // pred_fallthru
          _
        // Predicated region
        $region45: #{_lambda_.1} parent=11 // pred_check
          %p326 = pneg %p261
        $region46: #{_lambda_.1} parent=11 // pred_check_branch
          %328 = sbr.rel (%p326) target = $region48
        $region47: #{_lambda_.1} parent=11 // pred_region
          _
        $region48: #{_lambda_.1} parent=11 // pred_fallthru
          _
      $region12: #{_lambda_.1} parent=5 // pred_fallthru
        _
      %p329 = scmp.lt.s32.totalorder %s20, 2
      // Predicated region
      $region49: #{_lambda_.1} parent=5 // pred_check
        %p330 = pneg %p329
      $region50: #{_lambda_.1} parent=5 // pred_check_branch
        %332 = sbr.rel (%p330) target = $region52
      $region51: #{_lambda_.1} parent=5 // pred_region
        // Predicated region
        $region53: #{_lambda_.1} parent=51 // pred_check
          %p333 = pneg %p40
        $region54: #{_lambda_.1} parent=51 // pred_check_branch
          %335 = sbr.rel (%p333) target = $region56
        $region55: #{_lambda_.1} parent=51 // pred_region
          %s336 = smul.u32 2, %s20
          %p337 = scmp.lt.s32.totalorder %s336, 3
          %s338 = scalar_select %p337, %s336, 3
          %s339 = smul.addr %s338, 16
          %s340 = smul.addr %s339, 4
          %s341 = scalar_lea.vmem %s0, %s340
          %s342 = smul.u32 2, %s20
        $region56: #{_lambda_.1} parent=51 // pred_fallthru
          _
        // Predicated region
        $region57: #{_lambda_.1} parent=51 // pred_check
          %p343 = pneg %p66
        $region58: #{_lambda_.1} parent=51 // pred_check_branch
          %345 = sbr.rel (%p343) target = $region60
        $region59: #{_lambda_.1} parent=51 // pred_region
          %s346 = smul.u32 2, %s20
          %p347 = scmp.lt.s32.totalorder %s346, 3
          %s348 = scalar_select %p347, %s346, 3
          %s349 = smul.addr %s348, 16
          %s350 = smul.addr %s349, 4
          %s351 = scalar_lea.vmem %s1, %s350
          %s352 = smul.u32 2, %s20
        $region60: #{_lambda_.1} parent=51 // pred_fallthru
          _
      $region52: #{_lambda_.1} parent=5 // pred_fallthru
        _
      %p353 = scmp.le.s32.totalorder 1, %s20
      %p354 = scmp.lt.s32.totalorder %s20, 3
      %p355 = pnand %p353, %p354
      %p356 = pneg %p355
      // Predicated region
      $region61: #{_lambda_.1} parent=5 // pred_check
        _
      $region62: #{_lambda_.1} parent=5 // pred_check_branch
        %358 = sbr.rel (%p355) target = $region64
      $region63: #{_lambda_.1} parent=5 // pred_region
        %s359 = ssub.s32 %s20, 1
        %s360 = smul.u32 2, %s25
        %p361 = scmp.lt.s32.totalorder %s360, 3
        %s362 = scalar_select %p361, %s360, 3
        %s363 = smul.addr %s362, 16
        %s364 = smul.addr %s363, 4
        %s365 = scalar_lea.vmem %s0, %s364
        %p366 = pneg %p46
        %p367 = pneg %p43
        %s368 = smul.u32 2, %s25
        %p369 = scmp.lt.s32.totalorder %s368, 3
        %s370 = scalar_select %p369, %s368, 3
        %s371 = smul.addr %s370, 16
        %s372 = smul.addr %s371, 4
        %s373 = scalar_lea.vmem %s1, %s372
        %p374 = pneg %p72
        %p375 = pneg %p69
        %p376 = pneg %p93
        %p377 = pneg %p90
        %p378 = pneg %p114
        %p379 = pneg %p111
        %p380 = pneg %p135
        %p381 = pneg %p132
        %p382 = pneg %p156
        %p383 = pneg %p153
        %p384 = pneg %p177
        %p385 = pneg %p174
        %p386 = pneg %p198
        %p387 = pneg %p195
        %p388 = pneg %p219
        %p389 = pneg %p216
        %p390 = pneg %p240
        %p391 = pneg %p237
        %p392 = pneg %p261
        %p393 = pneg %p258
        %p394 = pneg %p287
        %p395 = pneg %p284
        %s396 = sand.u32 %s274, 1
        %s397 = scalar_lea.sflag [#allocation3], %s396
        %s398 = sand.u32 %s274, 1
        %s399 = smul.addr %s398, 256
        %s400 = scalar_lea.vmem [#allocation2], %s399
        %s401 = smul.u32 2, %s25
        %p402 = scmp.lt.s32.totalorder %s401, 3
        %s403 = scalar_select %p402, %s401, 3
        %s404 = smul.addr %s403, 16
        %s405 = smul.addr %s404, 4
        %s406 = scalar_lea.vmem %s0, %s405
        %s407 = smul.u32 2, %s25
        %s408 = smul.u32 2, %s25
        %p409 = scmp.lt.s32.totalorder %s408, 3
        %s410 = scalar_select %p409, %s408, 3
        %s411 = smul.addr %s410, 16
        %s412 = smul.addr %s411, 4
        %s413 = scalar_lea.vmem %s1, %s412
        %s414 = smul.u32 2, %s25
        %s415 = smul.u32 2, %s25
        %v416 = vld [vmem:[%s406] sm:$0xf]
        %v417 = vld [vmem:[%s406 + $0x4] sm:$0xf]
        %v418 = vld [vmem:[%s406 + $0x8] sm:$0xf]
        %v419 = vld [vmem:[%s406 + $0xc] sm:$0xf]
        %v420 = vld [vmem:[%s406 + $0x10] sm:$0xf]
        %v421 = vld [vmem:[%s406 + $0x14] sm:$0xf]
        %v422 = vld [vmem:[%s406 + $0x18] sm:$0xf]
        %v423 = vld [vmem:[%s406 + $0x1c] sm:$0xf]
        %v424 = vld [vmem:[%s406 + $0x20] sm:$0xf]
        %v425 = vld [vmem:[%s406 + $0x24] sm:$0xf]
        %v426 = vld [vmem:[%s406 + $0x28] sm:$0xf]
        %v427 = vld [vmem:[%s406 + $0x2c] sm:$0xf]
        %v428 = vld [vmem:[%s406 + $0x30] sm:$0xf]
        %v429 = vld [vmem:[%s406 + $0x34] sm:$0xf]
        %v430 = vld [vmem:[%s406 + $0x38] sm:$0xf]
        %v431 = vld [vmem:[%s406 + $0x3c] sm:$0xf]
        %v432 = vld [vmem:[%s406 + $0x40] sm:$0xf]
        %v433 = vld [vmem:[%s406 + $0x44] sm:$0xf]
        %v434 = vld [vmem:[%s406 + $0x48] sm:$0xf]
        %v435 = vld [vmem:[%s406 + $0x4c] sm:$0xf]
        %v436 = vld [vmem:[%s406 + $0x50] sm:$0xf]
        %v437 = vld [vmem:[%s406 + $0x54] sm:$0xf]
        %v438 = vld [vmem:[%s406 + $0x58] sm:$0xf]
        %v439 = vld [vmem:[%s406 + $0x5c] sm:$0xf]
        %v440 = vld [vmem:[%s406 + $0x60] sm:$0xf]
        %v441 = vld [vmem:[%s406 + $0x64] sm:$0xf]
        %v442 = vld [vmem:[%s406 + $0x68] sm:$0xf]
        %v443 = vld [vmem:[%s406 + $0x6c] sm:$0xf]
        %v444 = vld [vmem:[%s406 + $0x70] sm:$0xf]
        %v445 = vld [vmem:[%s406 + $0x74] sm:$0xf]
        %v446 = vld [vmem:[%s406 + $0x78] sm:$0xf]
        %v447 = vld [vmem:[%s406 + $0x7c] sm:$0xf]
        %v448 = vld [vmem:[%s413] sm:$0xf]
        %v449 = vld [vmem:[%s413 + $0x4] sm:$0xf]
        %v450 = vld [vmem:[%s413 + $0x8] sm:$0xf]
        %v451 = vld [vmem:[%s413 + $0xc] sm:$0xf]
        %v452 = vld [vmem:[%s413 + $0x10] sm:$0xf]
        %v453 = vld [vmem:[%s413 + $0x14] sm:$0xf]
        %v454 = vld [vmem:[%s413 + $0x18] sm:$0xf]
        %v455 = vld [vmem:[%s413 + $0x1c] sm:$0xf]
        %v456 = vld [vmem:[%s413 + $0x20] sm:$0xf]
        %v457 = vld [vmem:[%s413 + $0x24] sm:$0xf]
        %v458 = vld [vmem:[%s413 + $0x28] sm:$0xf]
        %v459 = vld [vmem:[%s413 + $0x2c] sm:$0xf]
        %v460 = vld [vmem:[%s413 + $0x30] sm:$0xf]
        %v461 = vld [vmem:[%s413 + $0x34] sm:$0xf]
        %v462 = vld [vmem:[%s413 + $0x38] sm:$0xf]
        %v463 = vld [vmem:[%s413 + $0x3c] sm:$0xf]
        %v464 = vld [vmem:[%s413 + $0x40] sm:$0xf]
        %v465 = vld [vmem:[%s413 + $0x44] sm:$0xf]
        %v466 = vld [vmem:[%s413 + $0x48] sm:$0xf]
        %v467 = vld [vmem:[%s413 + $0x4c] sm:$0xf]
        %v468 = vld [vmem:[%s413 + $0x50] sm:$0xf]
        %v469 = vld [vmem:[%s413 + $0x54] sm:$0xf]
        %v470 = vld [vmem:[%s413 + $0x58] sm:$0xf]
        %v471 = vld [vmem:[%s413 + $0x5c] sm:$0xf]
        %v472 = vld [vmem:[%s413 + $0x60] sm:$0xf]
        %v473 = vld [vmem:[%s413 + $0x64] sm:$0xf]
        %v474 = vld [vmem:[%s413 + $0x68] sm:$0xf]
        %v475 = vld [vmem:[%s413 + $0x6c] sm:$0xf]
        %v476 = vld [vmem:[%s413 + $0x70] sm:$0xf]
        %v477 = vld [vmem:[%s413 + $0x74] sm:$0xf]
        %v478 = vld [vmem:[%s413 + $0x78] sm:$0xf]
        %v479 = vld [vmem:[%s413 + $0x7c] sm:$0xf]
        %v480 = vld [vmem:[%s2] sm:$0xf]
        %v481 = vld [vmem:[%s2 + $0x4] sm:$0xf]
        %v482 = vld [vmem:[%s2 + $0x8] sm:$0xf]
        %v483 = vld [vmem:[%s2 + $0xc] sm:$0xf]
        %v484 = vld [vmem:[%s2 + $0x10] sm:$0xf]
        %v485 = vld [vmem:[%s2 + $0x14] sm:$0xf]
        %v486 = vld [vmem:[%s2 + $0x18] sm:$0xf]
        %v487 = vld [vmem:[%s2 + $0x1c] sm:$0xf]
        %v488 = vld [vmem:[%s2 + $0x20] sm:$0xf]
        %v489 = vld [vmem:[%s2 + $0x24] sm:$0xf]
        %v490 = vld [vmem:[%s2 + $0x28] sm:$0xf]
        %v491 = vld [vmem:[%s2 + $0x2c] sm:$0xf]
        %v492 = vld [vmem:[%s2 + $0x30] sm:$0xf]
        %v493 = vld [vmem:[%s2 + $0x34] sm:$0xf]
        %v494 = vld [vmem:[%s2 + $0x38] sm:$0xf]
        %v495 = vld [vmem:[%s2 + $0x3c] sm:$0xf]
        %v496 = vld [vmem:[%s3] sm:$0x1]
        %v498 = vperm.slane %v496, 0
        %v532 = vunpack.c.l.b16 %v416
        %v533 = vunpack.c.l.b16 %v417
        %v534 = vunpack.c.l.b16 %v418
        %v535 = vunpack.c.l.b16 %v419
        %v536 = vunpack.c.l.b16 %v420
        %v537 = vunpack.c.l.b16 %v421
        %v538 = vunpack.c.l.b16 %v422
        %v539 = vunpack.c.l.b16 %v423
        %v540 = vunpack.c.l.b16 %v424
        %v541 = vunpack.c.l.b16 %v425
        %v542 = vunpack.c.l.b16 %v426
        %v543 = vunpack.c.l.b16 %v427
        %v544 = vunpack.c.l.b16 %v428
        %v545 = vunpack.c.l.b16 %v429
        %v546 = vunpack.c.l.b16 %v430
        %v547 = vunpack.c.l.b16 %v431
        %v548 = vunpack.c.l.b16 %v432
        %v549 = vunpack.c.l.b16 %v433
        %v550 = vunpack.c.l.b16 %v434
        %v551 = vunpack.c.l.b16 %v435
        %v552 = vunpack.c.l.b16 %v436
        %v553 = vunpack.c.l.b16 %v437
        %v554 = vunpack.c.l.b16 %v438
        %v555 = vunpack.c.l.b16 %v439
        %v556 = vunpack.c.l.b16 %v440
        %v557 = vunpack.c.l.b16 %v441
        %v558 = vunpack.c.l.b16 %v442
        %v559 = vunpack.c.l.b16 %v443
        %v560 = vunpack.c.l.b16 %v444
        %v561 = vunpack.c.l.b16 %v445
        %v562 = vunpack.c.l.b16 %v446
        %v563 = vunpack.c.l.b16 %v447
        %v564 = vpack.c.b16 %v533, %v532
        %v565 = vpack.c.b16 %v535, %v534
        %v566 = vpack.c.b16 %v537, %v536
        %v567 = vpack.c.b16 %v539, %v538
        %v568 = vpack.c.b16 %v541, %v540
        %v569 = vpack.c.b16 %v543, %v542
        %v570 = vpack.c.b16 %v545, %v544
        %v571 = vpack.c.b16 %v547, %v546
        %v572 = vpack.c.b16 %v549, %v548
        %v573 = vpack.c.b16 %v551, %v550
        %v574 = vpack.c.b16 %v553, %v552
        %v575 = vpack.c.b16 %v555, %v554
        %v576 = vpack.c.b16 %v557, %v556
        %v577 = vpack.c.b16 %v559, %v558
        %v578 = vpack.c.b16 %v561, %v560
        %v579 = vpack.c.b16 %v563, %v562
        %v612 = vunpack.c.l.b16 %v480
        %v613 = vunpack.c.l.b16 %v481
        %v614 = vunpack.c.l.b16 %v482
        %v615 = vunpack.c.l.b16 %v483
        %v616 = vunpack.c.l.b16 %v484
        %v617 = vunpack.c.l.b16 %v485
        %v618 = vunpack.c.l.b16 %v486
        %v619 = vunpack.c.l.b16 %v487
        %v620 = vunpack.c.l.b16 %v488
        %v621 = vunpack.c.l.b16 %v489
        %v622 = vunpack.c.l.b16 %v490
        %v623 = vunpack.c.l.b16 %v491
        %v624 = vunpack.c.l.b16 %v492
        %v625 = vunpack.c.l.b16 %v493
        %v626 = vunpack.c.l.b16 %v494
        %v627 = vunpack.c.l.b16 %v495
        %v628 = vpack.c.b16 %v613, %v612
        %v629 = vpack.c.b16 %v615, %v614
        %v630 = vpack.c.b16 %v617, %v616
        %v631 = vpack.c.b16 %v619, %v618
        %v632 = vpack.c.b16 %v621, %v620
        %v633 = vpack.c.b16 %v623, %v622
        %v634 = vpack.c.b16 %v625, %v624
        %v635 = vpack.c.b16 %v627, %v626
        %644 = vmatpush.bf16.msra.mxu0 %v635
        %645 = vmatpush.bf16.msra.mxu0 %v634
        %646 = vmatpush.bf16.msra.mxu0 %v633
        %647 = vmatpush.bf16.msra.mxu0 %v632
        %648 = vmatpush.bf16.msra.mxu0 %v631
        %649 = vmatpush.bf16.msra.mxu0 %v630
        %650 = vmatpush.bf16.msra.mxu0 %v629
        %651 = vmatpush.bf16.msra.mxu0 %v628
        %652 = vmatmul.bf16.gmra.mxu0 %v564
        %v653 = vpop.f32.mrf.mxu0
        %v654 = vadd.f32 %v498, %v653
        %v655 = vpop.f32.mrf.mxu0
        %v656 = vadd.f32 %v498, %v655
        %657 = vmatmul.bf16.gmra.mxu0 %v565
        %v658 = vpop.f32.mrf.mxu0
        %v659 = vadd.f32 %v498, %v658
        %v660 = vpop.f32.mrf.mxu0
        %v661 = vadd.f32 %v498, %v660
        %662 = vmatmul.bf16.gmra.mxu0 %v566
        %v663 = vpop.f32.mrf.mxu0
        %v664 = vadd.f32 %v498, %v663
        %v665 = vpop.f32.mrf.mxu0
        %v666 = vadd.f32 %v498, %v665
        %667 = vmatmul.bf16.gmra.mxu0 %v567
        %v668 = vpop.f32.mrf.mxu0
        %v669 = vadd.f32 %v498, %v668
        %v670 = vpop.f32.mrf.mxu0
        %v671 = vadd.f32 %v498, %v670
        %672 = vmatmul.bf16.gmra.mxu0 %v568
        %v673 = vpop.f32.mrf.mxu0
        %v674 = vadd.f32 %v498, %v673
        %v675 = vpop.f32.mrf.mxu0
        %v676 = vadd.f32 %v498, %v675
        %677 = vmatmul.bf16.gmra.mxu0 %v569
        %v678 = vpop.f32.mrf.mxu0
        %v679 = vadd.f32 %v498, %v678
        %v680 = vpop.f32.mrf.mxu0
        %v681 = vadd.f32 %v498, %v680
        %682 = vmatmul.bf16.gmra.mxu0 %v570
        %v683 = vpop.f32.mrf.mxu0
        %v684 = vadd.f32 %v498, %v683
        %v685 = vpop.f32.mrf.mxu0
        %v686 = vadd.f32 %v498, %v685
        %687 = vmatmul.bf16.gmra.mxu0 %v571
        %v688 = vpop.f32.mrf.mxu0
        %v689 = vadd.f32 %v498, %v688
        %v690 = vpop.f32.mrf.mxu0
        %v691 = vadd.f32 %v498, %v690
        %692 = vmatmul.bf16.gmra.mxu0 %v572
        %v693 = vpop.f32.mrf.mxu0
        %v694 = vadd.f32 %v498, %v693
        %v695 = vpop.f32.mrf.mxu0
        %v696 = vadd.f32 %v498, %v695
        %697 = vmatmul.bf16.gmra.mxu0 %v573
        %v698 = vpop.f32.mrf.mxu0
        %v699 = vadd.f32 %v498, %v698
        %v700 = vpop.f32.mrf.mxu0
        %v701 = vadd.f32 %v498, %v700
        %702 = vmatmul.bf16.gmra.mxu0 %v574
        %v703 = vpop.f32.mrf.mxu0
        %v704 = vadd.f32 %v498, %v703
        %v705 = vpop.f32.mrf.mxu0
        %v706 = vadd.f32 %v498, %v705
        %707 = vmatmul.bf16.gmra.mxu0 %v575
        %v708 = vpop.f32.mrf.mxu0
        %v709 = vadd.f32 %v498, %v708
        %v710 = vpop.f32.mrf.mxu0
        %v711 = vadd.f32 %v498, %v710
        %712 = vmatmul.bf16.gmra.mxu0 %v576
        %v713 = vpop.f32.mrf.mxu0
        %v714 = vadd.f32 %v498, %v713
        %v715 = vpop.f32.mrf.mxu0
        %v716 = vadd.f32 %v498, %v715
        %717 = vmatmul.bf16.gmra.mxu0 %v577
        %v718 = vpop.f32.mrf.mxu0
        %v719 = vadd.f32 %v498, %v718
        %v720 = vpop.f32.mrf.mxu0
        %v721 = vadd.f32 %v498, %v720
        %722 = vmatmul.bf16.gmra.mxu0 %v578
        %v723 = vpop.f32.mrf.mxu0
        %v724 = vadd.f32 %v498, %v723
        %v725 = vpop.f32.mrf.mxu0
        %v726 = vadd.f32 %v498, %v725
        %727 = vmatmul.bf16.gmra.mxu0 %v579
        %v728 = vpop.f32.mrf.mxu0
        %v729 = vadd.f32 %v498, %v728
        %v730 = vpop.f32.mrf.mxu0
        %v731 = vadd.f32 %v498, %v730
        %732 = vdwg.mxu0
        %v733 = vmul.f32 %v654, 0.01
        %v734 = vmul.f32 %v656, 0.01
        %v735 = vmul.f32 %v659, 0.01
        %v736 = vmul.f32 %v661, 0.01
        %v737 = vmul.f32 %v664, 0.01
        %v738 = vmul.f32 %v666, 0.01
        %v739 = vmul.f32 %v669, 0.01
        %v740 = vmul.f32 %v671, 0.01
        %v741 = vmul.f32 %v674, 0.01
        %v742 = vmul.f32 %v676, 0.01
        %v743 = vmul.f32 %v679, 0.01
        %v744 = vmul.f32 %v681, 0.01
        %v745 = vmul.f32 %v684, 0.01
        %v746 = vmul.f32 %v686, 0.01
        %v747 = vmul.f32 %v689, 0.01
        %v748 = vmul.f32 %v691, 0.01
        %v749 = vmul.f32 %v694, 0.01
        %v750 = vmul.f32 %v696, 0.01
        %v751 = vmul.f32 %v699, 0.01
        %v752 = vmul.f32 %v701, 0.01
        %v753 = vmul.f32 %v704, 0.01
        %v754 = vmul.f32 %v706, 0.01
        %v755 = vmul.f32 %v709, 0.01
        %v756 = vmul.f32 %v711, 0.01
        %v757 = vmul.f32 %v714, 0.01
        %v758 = vmul.f32 %v716, 0.01
        %v759 = vmul.f32 %v719, 0.01
        %v760 = vmul.f32 %v721, 0.01
        %v761 = vmul.f32 %v724, 0.01
        %v762 = vmul.f32 %v726, 0.01
        %v763 = vmul.f32 %v729, 0.01
        %v764 = vmul.f32 %v731, 0.01
        %v765 = vmax.f32 %v654, %v733
        %v766 = vmax.f32 %v656, %v734
        %v767 = vmax.f32 %v659, %v735
        %v768 = vmax.f32 %v661, %v736
        %v769 = vmax.f32 %v664, %v737
        %v770 = vmax.f32 %v666, %v738
        %v771 = vmax.f32 %v669, %v739
        %v772 = vmax.f32 %v671, %v740
        %v773 = vmax.f32 %v674, %v741
        %v774 = vmax.f32 %v676, %v742
        %v775 = vmax.f32 %v679, %v743
        %v776 = vmax.f32 %v681, %v744
        %v777 = vmax.f32 %v684, %v745
        %v778 = vmax.f32 %v686, %v746
        %v779 = vmax.f32 %v689, %v747
        %v780 = vmax.f32 %v691, %v748
        %v781 = vmax.f32 %v694, %v749
        %v782 = vmax.f32 %v696, %v750
        %v783 = vmax.f32 %v699, %v751
        %v784 = vmax.f32 %v701, %v752
        %v785 = vmax.f32 %v704, %v753
        %v786 = vmax.f32 %v706, %v754
        %v787 = vmax.f32 %v709, %v755
        %v788 = vmax.f32 %v711, %v756
        %v789 = vmax.f32 %v714, %v757
        %v790 = vmax.f32 %v716, %v758
        %v791 = vmax.f32 %v719, %v759
        %v792 = vmax.f32 %v721, %v760
        %v793 = vmax.f32 %v724, %v761
        %v794 = vmax.f32 %v726, %v762
        %v795 = vmax.f32 %v729, %v763
        %v796 = vmax.f32 %v731, %v764
        %v797 = vpack.c.bf16 %v765, %v765
        %v798 = vpack.c.bf16 %v766, %v766
        %v799 = vpack.c.bf16 %v767, %v767
        %v800 = vpack.c.bf16 %v768, %v768
        %v801 = vpack.c.bf16 %v769, %v769
        %v802 = vpack.c.bf16 %v770, %v770
        %v803 = vpack.c.bf16 %v771, %v771
        %v804 = vpack.c.bf16 %v772, %v772
        %v805 = vpack.c.bf16 %v773, %v773
        %v806 = vpack.c.bf16 %v774, %v774
        %v807 = vpack.c.bf16 %v775, %v775
        %v808 = vpack.c.bf16 %v776, %v776
        %v809 = vpack.c.bf16 %v777, %v777
        %v810 = vpack.c.bf16 %v778, %v778
        %v811 = vpack.c.bf16 %v779, %v779
        %v812 = vpack.c.bf16 %v780, %v780
        %v813 = vpack.c.bf16 %v781, %v781
        %v814 = vpack.c.bf16 %v782, %v782
        %v815 = vpack.c.bf16 %v783, %v783
        %v816 = vpack.c.bf16 %v784, %v784
        %v817 = vpack.c.bf16 %v785, %v785
        %v818 = vpack.c.bf16 %v786, %v786
        %v819 = vpack.c.bf16 %v787, %v787
        %v820 = vpack.c.bf16 %v788, %v788
        %v821 = vpack.c.bf16 %v789, %v789
        %v822 = vpack.c.bf16 %v790, %v790
        %v823 = vpack.c.bf16 %v791, %v791
        %v824 = vpack.c.bf16 %v792, %v792
        %v825 = vpack.c.bf16 %v793, %v793
        %v826 = vpack.c.bf16 %v794, %v794
        %v827 = vpack.c.bf16 %v795, %v795
        %v828 = vpack.c.bf16 %v796, %v796
        %v845 = vunpack.c.l.b16 %v448
        %v846 = vunpack.c.l.b16 %v449
        %v847 = vunpack.c.l.b16 %v450
        %v848 = vunpack.c.l.b16 %v451
        %v849 = vunpack.c.l.b16 %v452
        %v850 = vunpack.c.l.b16 %v453
        %v851 = vunpack.c.l.b16 %v454
        %v852 = vunpack.c.l.b16 %v455
        %v853 = vunpack.c.l.b16 %v456
        %v854 = vunpack.c.l.b16 %v457
        %v855 = vunpack.c.l.b16 %v458
        %v856 = vunpack.c.l.b16 %v459
        %v857 = vunpack.c.l.b16 %v460
        %v858 = vunpack.c.l.b16 %v461
        %v859 = vunpack.c.l.b16 %v462
        %v860 = vunpack.c.l.b16 %v463
        %v861 = vpack.c.b16 %v846, %v845
        %v862 = vpack.c.b16 %v848, %v847
        %v863 = vpack.c.b16 %v850, %v849
        %v864 = vpack.c.b16 %v852, %v851
        %v865 = vpack.c.b16 %v854, %v853
        %v866 = vpack.c.b16 %v856, %v855
        %v867 = vpack.c.b16 %v858, %v857
        %v868 = vpack.c.b16 %v860, %v859
        %v893 = vunpack.c.l.b16 %v797
        %v894 = vunpack.c.l.b16 %v798
        %v895 = vunpack.c.l.b16 %v799
        %v896 = vunpack.c.l.b16 %v800
        %v897 = vunpack.c.l.b16 %v801
        %v898 = vunpack.c.l.b16 %v802
        %v899 = vunpack.c.l.b16 %v803
        %v900 = vunpack.c.l.b16 %v804
        %v901 = vunpack.c.l.b16 %v805
        %v902 = vunpack.c.l.b16 %v806
        %v903 = vunpack.c.l.b16 %v807
        %v904 = vunpack.c.l.b16 %v808
        %v905 = vunpack.c.l.b16 %v809
        %v906 = vunpack.c.l.b16 %v810
        %v907 = vunpack.c.l.b16 %v811
        %v908 = vunpack.c.l.b16 %v812
        %v909 = vpack.c.b16 %v894, %v893
        %v910 = vpack.c.b16 %v896, %v895
        %v911 = vpack.c.b16 %v898, %v897
        %v912 = vpack.c.b16 %v900, %v899
        %v913 = vpack.c.b16 %v902, %v901
        %v914 = vpack.c.b16 %v904, %v903
        %v915 = vpack.c.b16 %v906, %v905
        %v916 = vpack.c.b16 %v908, %v907
        %925 = vmatpush.bf16.msra.mxu0 %v916
        %926 = vmatpush.bf16.msra.mxu0 %v915
        %927 = vmatpush.bf16.msra.mxu0 %v914
        %928 = vmatpush.bf16.msra.mxu0 %v913
        %929 = vmatpush.bf16.msra.mxu0 %v912
        %930 = vmatpush.bf16.msra.mxu0 %v911
        %931 = vmatpush.bf16.msra.mxu0 %v910
        %932 = vmatpush.bf16.msra.mxu0 %v909
        %933 = vmatmul.bf16.gmra.mxu0 %v861
        %v934 = vpop.f32.mrf.mxu0
        %v935 = vadd.f32 0.0, %v934
        %v936 = vpop.f32.mrf.mxu0
        %v937 = vadd.f32 0.0, %v936
        %938 = vmatmul.bf16.gmra.mxu0 %v862
        %v939 = vpop.f32.mrf.mxu0
        %v940 = vadd.f32 0.0, %v939
        %v941 = vpop.f32.mrf.mxu0
        %v942 = vadd.f32 0.0, %v941
        %943 = vmatmul.bf16.gmra.mxu0 %v863
        %v944 = vpop.f32.mrf.mxu0
        %v945 = vadd.f32 0.0, %v944
        %v946 = vpop.f32.mrf.mxu0
        %v947 = vadd.f32 0.0, %v946
        %948 = vmatmul.bf16.gmra.mxu0 %v864
        %v949 = vpop.f32.mrf.mxu0
        %v950 = vadd.f32 0.0, %v949
        %v951 = vpop.f32.mrf.mxu0
        %v952 = vadd.f32 0.0, %v951
        %953 = vmatmul.bf16.gmra.mxu0 %v865
        %v954 = vpop.f32.mrf.mxu0
        %v955 = vadd.f32 0.0, %v954
        %v956 = vpop.f32.mrf.mxu0
        %v957 = vadd.f32 0.0, %v956
        %958 = vmatmul.bf16.gmra.mxu0 %v866
        %v959 = vpop.f32.mrf.mxu0
        %v960 = vadd.f32 0.0, %v959
        %v961 = vpop.f32.mrf.mxu0
        %v962 = vadd.f32 0.0, %v961
        %963 = vmatmul.bf16.gmra.mxu0 %v867
        %v964 = vpop.f32.mrf.mxu0
        %v965 = vadd.f32 0.0, %v964
        %v966 = vpop.f32.mrf.mxu0
        %v967 = vadd.f32 0.0, %v966
        %968 = vmatmul.bf16.gmra.mxu0 %v868
        %v969 = vpop.f32.mrf.mxu0
        %v970 = vadd.f32 0.0, %v969
        %v971 = vpop.f32.mrf.mxu0
        %v972 = vadd.f32 0.0, %v971
        %973 = vdwg.mxu0
        %v990 = vunpack.c.l.b16 %v464
        %v991 = vunpack.c.l.b16 %v465
        %v992 = vunpack.c.l.b16 %v466
        %v993 = vunpack.c.l.b16 %v467
        %v994 = vunpack.c.l.b16 %v468
        %v995 = vunpack.c.l.b16 %v469
        %v996 = vunpack.c.l.b16 %v470
        %v997 = vunpack.c.l.b16 %v471
        %v998 = vunpack.c.l.b16 %v472
        %v999 = vunpack.c.l.b16 %v473
        %v1000 = vunpack.c.l.b16 %v474
        %v1001 = vunpack.c.l.b16 %v475
        %v1002 = vunpack.c.l.b16 %v476
        %v1003 = vunpack.c.l.b16 %v477
        %v1004 = vunpack.c.l.b16 %v478
        %v1005 = vunpack.c.l.b16 %v479
        %v1006 = vpack.c.b16 %v991, %v990
        %v1007 = vpack.c.b16 %v993, %v992
        %v1008 = vpack.c.b16 %v995, %v994
        %v1009 = vpack.c.b16 %v997, %v996
        %v1010 = vpack.c.b16 %v999, %v998
        %v1011 = vpack.c.b16 %v1001, %v1000
        %v1012 = vpack.c.b16 %v1003, %v1002
        %v1013 = vpack.c.b16 %v1005, %v1004
        %v1038 = vunpack.c.l.b16 %v813
        %v1039 = vunpack.c.l.b16 %v814
        %v1040 = vunpack.c.l.b16 %v815
        %v1041 = vunpack.c.l.b16 %v816
        %v1042 = vunpack.c.l.b16 %v817
        %v1043 = vunpack.c.l.b16 %v818
        %v1044 = vunpack.c.l.b16 %v819
        %v1045 = vunpack.c.l.b16 %v820
        %v1046 = vunpack.c.l.b16 %v821
        %v1047 = vunpack.c.l.b16 %v822
        %v1048 = vunpack.c.l.b16 %v823
        %v1049 = vunpack.c.l.b16 %v824
        %v1050 = vunpack.c.l.b16 %v825
        %v1051 = vunpack.c.l.b16 %v826
        %v1052 = vunpack.c.l.b16 %v827
        %v1053 = vunpack.c.l.b16 %v828
        %v1054 = vpack.c.b16 %v1039, %v1038
        %v1055 = vpack.c.b16 %v1041, %v1040
        %v1056 = vpack.c.b16 %v1043, %v1042
        %v1057 = vpack.c.b16 %v1045, %v1044
        %v1058 = vpack.c.b16 %v1047, %v1046
        %v1059 = vpack.c.b16 %v1049, %v1048
        %v1060 = vpack.c.b16 %v1051, %v1050
        %v1061 = vpack.c.b16 %v1053, %v1052
        %1070 = vmatpush.bf16.msra.mxu0 %v1061
        %1071 = vmatpush.bf16.msra.mxu0 %v1060
        %1072 = vmatpush.bf16.msra.mxu0 %v1059
        %1073 = vmatpush.bf16.msra.mxu0 %v1058
        %1074 = vmatpush.bf16.msra.mxu0 %v1057
        %1075 = vmatpush.bf16.msra.mxu0 %v1056
        %1076 = vmatpush.bf16.msra.mxu0 %v1055
        %1077 = vmatpush.bf16.msra.mxu0 %v1054
        %1078 = vmatmul.bf16.gmra.mxu0 %v1006
        %v1079 = vpop.f32.mrf.mxu0
        %v1080 = vadd.f32 0.0, %v1079
        %v1081 = vpop.f32.mrf.mxu0
        %v1082 = vadd.f32 0.0, %v1081
        %1083 = vmatmul.bf16.gmra.mxu0 %v1007
        %v1084 = vpop.f32.mrf.mxu0
        %v1085 = vadd.f32 0.0, %v1084
        %v1086 = vpop.f32.mrf.mxu0
        %v1087 = vadd.f32 0.0, %v1086
        %1088 = vmatmul.bf16.gmra.mxu0 %v1008
        %v1089 = vpop.f32.mrf.mxu0
        %v1090 = vadd.f32 0.0, %v1089
        %v1091 = vpop.f32.mrf.mxu0
        %v1092 = vadd.f32 0.0, %v1091
        %1093 = vmatmul.bf16.gmra.mxu0 %v1009
        %v1094 = vpop.f32.mrf.mxu0
        %v1095 = vadd.f32 0.0, %v1094
        %v1096 = vpop.f32.mrf.mxu0
        %v1097 = vadd.f32 0.0, %v1096
        %1098 = vmatmul.bf16.gmra.mxu0 %v1010
        %v1099 = vpop.f32.mrf.mxu0
        %v1100 = vadd.f32 0.0, %v1099
        %v1101 = vpop.f32.mrf.mxu0
        %v1102 = vadd.f32 0.0, %v1101
        %1103 = vmatmul.bf16.gmra.mxu0 %v1011
        %v1104 = vpop.f32.mrf.mxu0
        %v1105 = vadd.f32 0.0, %v1104
        %v1106 = vpop.f32.mrf.mxu0
        %v1107 = vadd.f32 0.0, %v1106
        %1108 = vmatmul.bf16.gmra.mxu0 %v1012
        %v1109 = vpop.f32.mrf.mxu0
        %v1110 = vadd.f32 0.0, %v1109
        %v1111 = vpop.f32.mrf.mxu0
        %v1112 = vadd.f32 0.0, %v1111
        %1113 = vmatmul.bf16.gmra.mxu0 %v1013
        %v1114 = vpop.f32.mrf.mxu0
        %v1115 = vadd.f32 0.0, %v1114
        %v1116 = vpop.f32.mrf.mxu0
        %v1117 = vadd.f32 0.0, %v1116
        %1118 = vdwg.mxu0
        %v1119 = vpack.c.bf16 %v937, %v935
        %v1120 = vpack.c.bf16 %v942, %v940
        %v1121 = vpack.c.bf16 %v947, %v945
        %v1122 = vpack.c.bf16 %v952, %v950
        %v1123 = vpack.c.bf16 %v957, %v955
        %v1124 = vpack.c.bf16 %v962, %v960
        %v1125 = vpack.c.bf16 %v967, %v965
        %v1126 = vpack.c.bf16 %v972, %v970
        %v1127 = vpack.c.bf16 %v1082, %v1080
        %v1128 = vpack.c.bf16 %v1087, %v1085
        %v1129 = vpack.c.bf16 %v1092, %v1090
        %v1130 = vpack.c.bf16 %v1097, %v1095
        %v1131 = vpack.c.bf16 %v1102, %v1100
        %v1132 = vpack.c.bf16 %v1107, %v1105
        %v1133 = vpack.c.bf16 %v1112, %v1110
        %v1134 = vpack.c.bf16 %v1117, %v1115
        %v1135 = vld [vmem:[%s7] sm:$0xf]
        %v1136 = vld [vmem:[%s7 + $0x4] sm:$0xf]
        %v1137 = vld [vmem:[%s7 + $0x8] sm:$0xf]
        %v1138 = vld [vmem:[%s7 + $0xc] sm:$0xf]
        %v1139 = vld [vmem:[%s7 + $0x10] sm:$0xf]
        %v1140 = vld [vmem:[%s7 + $0x14] sm:$0xf]
        %v1141 = vld [vmem:[%s7 + $0x18] sm:$0xf]
        %v1142 = vld [vmem:[%s7 + $0x1c] sm:$0xf]
        %v1143 = vld [vmem:[%s7 + $0x20] sm:$0xf]
        %v1144 = vld [vmem:[%s7 + $0x24] sm:$0xf]
        %v1145 = vld [vmem:[%s7 + $0x28] sm:$0xf]
        %v1146 = vld [vmem:[%s7 + $0x2c] sm:$0xf]
        %v1147 = vld [vmem:[%s7 + $0x30] sm:$0xf]
        %v1148 = vld [vmem:[%s7 + $0x34] sm:$0xf]
        %v1149 = vld [vmem:[%s7 + $0x38] sm:$0xf]
        %v1150 = vld [vmem:[%s7 + $0x3c] sm:$0xf]
        %v1151 = vld [vmem:[%s8] sm:$0xf]
        %v1152 = vld [vmem:[%s8 + $0x4] sm:$0xf]
        %v1153 = vld [vmem:[%s8 + $0x8] sm:$0xf]
        %v1154 = vld [vmem:[%s8 + $0xc] sm:$0xf]
        %v1155 = vld [vmem:[%s8 + $0x10] sm:$0xf]
        %v1156 = vld [vmem:[%s8 + $0x14] sm:$0xf]
        %v1157 = vld [vmem:[%s8 + $0x18] sm:$0xf]
        %v1158 = vld [vmem:[%s8 + $0x1c] sm:$0xf]
        %v1159 = vld [vmem:[%s8 + $0x20] sm:$0xf]
        %v1160 = vld [vmem:[%s8 + $0x24] sm:$0xf]
        %v1161 = vld [vmem:[%s8 + $0x28] sm:$0xf]
        %v1162 = vld [vmem:[%s8 + $0x2c] sm:$0xf]
        %v1163 = vld [vmem:[%s8 + $0x30] sm:$0xf]
        %v1164 = vld [vmem:[%s8 + $0x34] sm:$0xf]
        %v1165 = vld [vmem:[%s8 + $0x38] sm:$0xf]
        %v1166 = vld [vmem:[%s8 + $0x3c] sm:$0xf]
        %v1183 = vunpack.c.l.b16 %v1151
        %v1184 = vunpack.c.l.b16 %v1152
        %v1185 = vunpack.c.l.b16 %v1153
        %v1186 = vunpack.c.l.b16 %v1154
        %v1187 = vunpack.c.l.b16 %v1155
        %v1188 = vunpack.c.l.b16 %v1156
        %v1189 = vunpack.c.l.b16 %v1157
        %v1190 = vunpack.c.l.b16 %v1158
        %v1191 = vunpack.c.l.b16 %v1159
        %v1192 = vunpack.c.l.b16 %v1160
        %v1193 = vunpack.c.l.b16 %v1161
        %v1194 = vunpack.c.l.b16 %v1162
        %v1195 = vunpack.c.l.b16 %v1163
        %v1196 = vunpack.c.l.b16 %v1164
        %v1197 = vunpack.c.l.b16 %v1165
        %v1198 = vunpack.c.l.b16 %v1166
        %v1199 = vpack.c.b16 %v1184, %v1183
        %v1200 = vpack.c.b16 %v1186, %v1185
        %v1201 = vpack.c.b16 %v1188, %v1187
        %v1202 = vpack.c.b16 %v1190, %v1189
        %v1203 = vpack.c.b16 %v1192, %v1191
        %v1204 = vpack.c.b16 %v1194, %v1193
        %v1205 = vpack.c.b16 %v1196, %v1195
        %v1206 = vpack.c.b16 %v1198, %v1197
        %1215 = vmatpush.bf16.msra.mxu0 %v1206
        %1216 = vmatpush.bf16.msra.mxu0 %v1205
        %1217 = vmatpush.bf16.msra.mxu0 %v1204
        %1218 = vmatpush.bf16.msra.mxu0 %v1203
        %1219 = vmatpush.bf16.msra.mxu0 %v1202
        %1220 = vmatpush.bf16.msra.mxu0 %v1201
        %1221 = vmatpush.bf16.msra.mxu0 %v1200
        %1222 = vmatpush.bf16.msra.mxu0 %v1199
        %1223 = vmatmul.bf16.gmra.mxu0 %v1119
        %v1224 = vpop.f32.mrf.mxu0
        %v1225 = vadd.f32 0.0, %v1224
        %v1226 = vpop.f32.mrf.mxu0
        %v1227 = vadd.f32 0.0, %v1226
        %1228 = vmatmul.bf16.gmra.mxu0 %v1120
        %v1229 = vpop.f32.mrf.mxu0
        %v1230 = vadd.f32 0.0, %v1229
        %v1231 = vpop.f32.mrf.mxu0
        %v1232 = vadd.f32 0.0, %v1231
        %1233 = vmatmul.bf16.gmra.mxu0 %v1121
        %v1234 = vpop.f32.mrf.mxu0
        %v1235 = vadd.f32 0.0, %v1234
        %v1236 = vpop.f32.mrf.mxu0
        %v1237 = vadd.f32 0.0, %v1236
        %1238 = vmatmul.bf16.gmra.mxu0 %v1122
        %v1239 = vpop.f32.mrf.mxu0
        %v1240 = vadd.f32 0.0, %v1239
        %v1241 = vpop.f32.mrf.mxu0
        %v1242 = vadd.f32 0.0, %v1241
        %1243 = vmatmul.bf16.gmra.mxu0 %v1123
        %v1244 = vpop.f32.mrf.mxu0
        %v1245 = vadd.f32 0.0, %v1244
        %v1246 = vpop.f32.mrf.mxu0
        %v1247 = vadd.f32 0.0, %v1246
        %1248 = vmatmul.bf16.gmra.mxu0 %v1124
        %v1249 = vpop.f32.mrf.mxu0
        %v1250 = vadd.f32 0.0, %v1249
        %v1251 = vpop.f32.mrf.mxu0
        %v1252 = vadd.f32 0.0, %v1251
        %1253 = vmatmul.bf16.gmra.mxu0 %v1125
        %v1254 = vpop.f32.mrf.mxu0
        %v1255 = vadd.f32 0.0, %v1254
        %v1256 = vpop.f32.mrf.mxu0
        %v1257 = vadd.f32 0.0, %v1256
        %1258 = vmatmul.bf16.gmra.mxu0 %v1126
        %v1259 = vpop.f32.mrf.mxu0
        %v1260 = vadd.f32 0.0, %v1259
        %v1261 = vpop.f32.mrf.mxu0
        %v1262 = vadd.f32 0.0, %v1261
        %1263 = vmatmul.bf16.gmra.mxu0 %v1127
        %v1264 = vpop.f32.mrf.mxu0
        %v1265 = vadd.f32 0.0, %v1264
        %v1266 = vpop.f32.mrf.mxu0
        %v1267 = vadd.f32 0.0, %v1266
        %1268 = vmatmul.bf16.gmra.mxu0 %v1128
        %v1269 = vpop.f32.mrf.mxu0
        %v1270 = vadd.f32 0.0, %v1269
        %v1271 = vpop.f32.mrf.mxu0
        %v1272 = vadd.f32 0.0, %v1271
        %1273 = vmatmul.bf16.gmra.mxu0 %v1129
        %v1274 = vpop.f32.mrf.mxu0
        %v1275 = vadd.f32 0.0, %v1274
        %v1276 = vpop.f32.mrf.mxu0
        %v1277 = vadd.f32 0.0, %v1276
        %1278 = vmatmul.bf16.gmra.mxu0 %v1130
        %v1279 = vpop.f32.mrf.mxu0
        %v1280 = vadd.f32 0.0, %v1279
        %v1281 = vpop.f32.mrf.mxu0
        %v1282 = vadd.f32 0.0, %v1281
        %1283 = vmatmul.bf16.gmra.mxu0 %v1131
        %v1284 = vpop.f32.mrf.mxu0
        %v1285 = vadd.f32 0.0, %v1284
        %v1286 = vpop.f32.mrf.mxu0
        %v1287 = vadd.f32 0.0, %v1286
        %1288 = vmatmul.bf16.gmra.mxu0 %v1132
        %v1289 = vpop.f32.mrf.mxu0
        %v1290 = vadd.f32 0.0, %v1289
        %v1291 = vpop.f32.mrf.mxu0
        %v1292 = vadd.f32 0.0, %v1291
        %1293 = vmatmul.bf16.gmra.mxu0 %v1133
        %v1294 = vpop.f32.mrf.mxu0
        %v1295 = vadd.f32 0.0, %v1294
        %v1296 = vpop.f32.mrf.mxu0
        %v1297 = vadd.f32 0.0, %v1296
        %1298 = vmatmul.bf16.gmra.mxu0 %v1134
        %v1299 = vpop.f32.mrf.mxu0
        %v1300 = vadd.f32 0.0, %v1299
        %v1301 = vpop.f32.mrf.mxu0
        %v1302 = vadd.f32 0.0, %v1301
        %1303 = vdwg.mxu0
        %v1320 = vunpack.c.l.b16 %v1135
        %v1321 = vunpack.c.l.b16 %v1136
        %v1322 = vunpack.c.l.b16 %v1137
        %v1323 = vunpack.c.l.b16 %v1138
        %v1324 = vunpack.c.l.b16 %v1139
        %v1325 = vunpack.c.l.b16 %v1140
        %v1326 = vunpack.c.l.b16 %v1141
        %v1327 = vunpack.c.l.b16 %v1142
        %v1328 = vunpack.c.l.b16 %v1143
        %v1329 = vunpack.c.l.b16 %v1144
        %v1330 = vunpack.c.l.b16 %v1145
        %v1331 = vunpack.c.l.b16 %v1146
        %v1332 = vunpack.c.l.b16 %v1147
        %v1333 = vunpack.c.l.b16 %v1148
        %v1334 = vunpack.c.l.b16 %v1149
        %v1335 = vunpack.c.l.b16 %v1150
        %v1336 = vpack.c.b16 %v1321, %v1320
        %v1337 = vpack.c.b16 %v1323, %v1322
        %v1338 = vpack.c.b16 %v1325, %v1324
        %v1339 = vpack.c.b16 %v1327, %v1326
        %v1340 = vpack.c.b16 %v1329, %v1328
        %v1341 = vpack.c.b16 %v1331, %v1330
        %v1342 = vpack.c.b16 %v1333, %v1332
        %v1343 = vpack.c.b16 %v1335, %v1334
        %1352 = vmatpush.bf16.msra.mxu0 %v1343
        %1353 = vmatpush.bf16.msra.mxu0 %v1342
        %1354 = vmatpush.bf16.msra.mxu0 %v1341
        %1355 = vmatpush.bf16.msra.mxu0 %v1340
        %1356 = vmatpush.bf16.msra.mxu0 %v1339
        %1357 = vmatpush.bf16.msra.mxu0 %v1338
        %1358 = vmatpush.bf16.msra.mxu0 %v1337
        %1359 = vmatpush.bf16.msra.mxu0 %v1336
        %1360 = vmatmul.bf16.gmra.mxu0 %v909
        %v1361 = vpop.f32.mrf.mxu0
        %v1362 = vadd.f32 %v1225, %v1361
        %v1363 = vpop.f32.mrf.mxu0
        %v1364 = vadd.f32 %v1227, %v1363
        %1365 = vmatmul.bf16.gmra.mxu0 %v910
        %v1366 = vpop.f32.mrf.mxu0
        %v1367 = vadd.f32 %v1230, %v1366
        %v1368 = vpop.f32.mrf.mxu0
        %v1369 = vadd.f32 %v1232, %v1368
        %1370 = vmatmul.bf16.gmra.mxu0 %v911
        %v1371 = vpop.f32.mrf.mxu0
        %v1372 = vadd.f32 %v1235, %v1371
        %v1373 = vpop.f32.mrf.mxu0
        %v1374 = vadd.f32 %v1237, %v1373
        %1375 = vmatmul.bf16.gmra.mxu0 %v912
        %v1376 = vpop.f32.mrf.mxu0
        %v1377 = vadd.f32 %v1240, %v1376
        %v1378 = vpop.f32.mrf.mxu0
        %v1379 = vadd.f32 %v1242, %v1378
        %1380 = vmatmul.bf16.gmra.mxu0 %v913
        %v1381 = vpop.f32.mrf.mxu0
        %v1382 = vadd.f32 %v1245, %v1381
        %v1383 = vpop.f32.mrf.mxu0
        %v1384 = vadd.f32 %v1247, %v1383
        %1385 = vmatmul.bf16.gmra.mxu0 %v914
        %v1386 = vpop.f32.mrf.mxu0
        %v1387 = vadd.f32 %v1250, %v1386
        %v1388 = vpop.f32.mrf.mxu0
        %v1389 = vadd.f32 %v1252, %v1388
        %1390 = vmatmul.bf16.gmra.mxu0 %v915
        %v1391 = vpop.f32.mrf.mxu0
        %v1392 = vadd.f32 %v1255, %v1391
        %v1393 = vpop.f32.mrf.mxu0
        %v1394 = vadd.f32 %v1257, %v1393
        %1395 = vmatmul.bf16.gmra.mxu0 %v916
        %v1396 = vpop.f32.mrf.mxu0
        %v1397 = vadd.f32 %v1260, %v1396
        %v1398 = vpop.f32.mrf.mxu0
        %v1399 = vadd.f32 %v1262, %v1398
        %1400 = vmatmul.bf16.gmra.mxu0 %v1054
        %v1401 = vpop.f32.mrf.mxu0
        %v1402 = vadd.f32 %v1265, %v1401
        %v1403 = vpop.f32.mrf.mxu0
        %v1404 = vadd.f32 %v1267, %v1403
        %1405 = vmatmul.bf16.gmra.mxu0 %v1055
        %v1406 = vpop.f32.mrf.mxu0
        %v1407 = vadd.f32 %v1270, %v1406
        %v1408 = vpop.f32.mrf.mxu0
        %v1409 = vadd.f32 %v1272, %v1408
        %1410 = vmatmul.bf16.gmra.mxu0 %v1056
        %v1411 = vpop.f32.mrf.mxu0
        %v1412 = vadd.f32 %v1275, %v1411
        %v1413 = vpop.f32.mrf.mxu0
        %v1414 = vadd.f32 %v1277, %v1413
        %1415 = vmatmul.bf16.gmra.mxu0 %v1057
        %v1416 = vpop.f32.mrf.mxu0
        %v1417 = vadd.f32 %v1280, %v1416
        %v1418 = vpop.f32.mrf.mxu0
        %v1419 = vadd.f32 %v1282, %v1418
        %1420 = vmatmul.bf16.gmra.mxu0 %v1058
        %v1421 = vpop.f32.mrf.mxu0
        %v1422 = vadd.f32 %v1285, %v1421
        %v1423 = vpop.f32.mrf.mxu0
        %v1424 = vadd.f32 %v1287, %v1423
        %1425 = vmatmul.bf16.gmra.mxu0 %v1059
        %v1426 = vpop.f32.mrf.mxu0
        %v1427 = vadd.f32 %v1290, %v1426
        %v1428 = vpop.f32.mrf.mxu0
        %v1429 = vadd.f32 %v1292, %v1428
        %1430 = vmatmul.bf16.gmra.mxu0 %v1060
        %v1431 = vpop.f32.mrf.mxu0
        %v1432 = vadd.f32 %v1295, %v1431
        %v1433 = vpop.f32.mrf.mxu0
        %v1434 = vadd.f32 %v1297, %v1433
        %1435 = vmatmul.bf16.gmra.mxu0 %v1061
        %v1436 = vpop.f32.mrf.mxu0
        %v1437 = vadd.f32 %v1300, %v1436
        %v1438 = vpop.f32.mrf.mxu0
        %v1439 = vadd.f32 %v1302, %v1438
        %1440 = vdwg.mxu0
        %v1441 = vld [vmem:[%s9] sm:$0x1]
        %v1443 = vperm.slane %v1441, 0
        %v1445 = vadd.f32 %v1362, %v1443
        %v1446 = vadd.f32 %v1364, %v1443
        %v1447 = vadd.f32 %v1367, %v1443
        %v1448 = vadd.f32 %v1369, %v1443
        %v1449 = vadd.f32 %v1372, %v1443
        %v1450 = vadd.f32 %v1374, %v1443
        %v1451 = vadd.f32 %v1377, %v1443
        %v1452 = vadd.f32 %v1379, %v1443
        %v1453 = vadd.f32 %v1382, %v1443
        %v1454 = vadd.f32 %v1384, %v1443
        %v1455 = vadd.f32 %v1387, %v1443
        %v1456 = vadd.f32 %v1389, %v1443
        %v1457 = vadd.f32 %v1392, %v1443
        %v1458 = vadd.f32 %v1394, %v1443
        %v1459 = vadd.f32 %v1397, %v1443
        %v1460 = vadd.f32 %v1399, %v1443
        %v1461 = vadd.f32 %v1402, %v1443
        %v1462 = vadd.f32 %v1404, %v1443
        %v1463 = vadd.f32 %v1407, %v1443
        %v1464 = vadd.f32 %v1409, %v1443
        %v1465 = vadd.f32 %v1412, %v1443
        %v1466 = vadd.f32 %v1414, %v1443
        %v1467 = vadd.f32 %v1417, %v1443
        %v1468 = vadd.f32 %v1419, %v1443
        %v1469 = vadd.f32 %v1422, %v1443
        %v1470 = vadd.f32 %v1424, %v1443
        %v1471 = vadd.f32 %v1427, %v1443
        %v1472 = vadd.f32 %v1429, %v1443
        %v1473 = vadd.f32 %v1432, %v1443
        %v1474 = vadd.f32 %v1434, %v1443
        %v1475 = vadd.f32 %v1437, %v1443
        %v1476 = vadd.f32 %v1439, %v1443
        %v1477 = vld [vmem:[%s4] sm:$0xf]
        %v1478 = vld [vmem:[%s4 + $0x4] sm:$0xf]
        %v1479 = vld [vmem:[%s4 + $0x8] sm:$0xf]
        %v1480 = vld [vmem:[%s4 + $0xc] sm:$0xf]
        %v1481 = vld [vmem:[%s4 + $0x10] sm:$0xf]
        %v1482 = vld [vmem:[%s4 + $0x14] sm:$0xf]
        %v1483 = vld [vmem:[%s4 + $0x18] sm:$0xf]
        %v1484 = vld [vmem:[%s4 + $0x1c] sm:$0xf]
        %v1485 = vld [vmem:[%s4 + $0x20] sm:$0xf]
        %v1486 = vld [vmem:[%s4 + $0x24] sm:$0xf]
        %v1487 = vld [vmem:[%s4 + $0x28] sm:$0xf]
        %v1488 = vld [vmem:[%s4 + $0x2c] sm:$0xf]
        %v1489 = vld [vmem:[%s4 + $0x30] sm:$0xf]
        %v1490 = vld [vmem:[%s4 + $0x34] sm:$0xf]
        %v1491 = vld [vmem:[%s4 + $0x38] sm:$0xf]
        %v1492 = vld [vmem:[%s4 + $0x3c] sm:$0xf]
        %v1493 = vld [vmem:[%s5] sm:$0xf]
        %v1494 = vld [vmem:[%s5 + $0x4] sm:$0xf]
        %v1495 = vld [vmem:[%s5 + $0x8] sm:$0xf]
        %v1496 = vld [vmem:[%s5 + $0xc] sm:$0xf]
        %v1497 = vld [vmem:[%s5 + $0x10] sm:$0xf]
        %v1498 = vld [vmem:[%s5 + $0x14] sm:$0xf]
        %v1499 = vld [vmem:[%s5 + $0x18] sm:$0xf]
        %v1500 = vld [vmem:[%s5 + $0x1c] sm:$0xf]
        %v1501 = vld [vmem:[%s5 + $0x20] sm:$0xf]
        %v1502 = vld [vmem:[%s5 + $0x24] sm:$0xf]
        %v1503 = vld [vmem:[%s5 + $0x28] sm:$0xf]
        %v1504 = vld [vmem:[%s5 + $0x2c] sm:$0xf]
        %v1505 = vld [vmem:[%s5 + $0x30] sm:$0xf]
        %v1506 = vld [vmem:[%s5 + $0x34] sm:$0xf]
        %v1507 = vld [vmem:[%s5 + $0x38] sm:$0xf]
        %v1508 = vld [vmem:[%s5 + $0x3c] sm:$0xf]
        %v1525 = vunpack.c.l.b16 %v1493
        %v1526 = vunpack.c.l.b16 %v1494
        %v1527 = vunpack.c.l.b16 %v1495
        %v1528 = vunpack.c.l.b16 %v1496
        %v1529 = vunpack.c.l.b16 %v1497
        %v1530 = vunpack.c.l.b16 %v1498
        %v1531 = vunpack.c.l.b16 %v1499
        %v1532 = vunpack.c.l.b16 %v1500
        %v1533 = vunpack.c.l.b16 %v1501
        %v1534 = vunpack.c.l.b16 %v1502
        %v1535 = vunpack.c.l.b16 %v1503
        %v1536 = vunpack.c.l.b16 %v1504
        %v1537 = vunpack.c.l.b16 %v1505
        %v1538 = vunpack.c.l.b16 %v1506
        %v1539 = vunpack.c.l.b16 %v1507
        %v1540 = vunpack.c.l.b16 %v1508
        %v1541 = vpack.c.b16 %v1526, %v1525
        %v1542 = vpack.c.b16 %v1528, %v1527
        %v1543 = vpack.c.b16 %v1530, %v1529
        %v1544 = vpack.c.b16 %v1532, %v1531
        %v1545 = vpack.c.b16 %v1534, %v1533
        %v1546 = vpack.c.b16 %v1536, %v1535
        %v1547 = vpack.c.b16 %v1538, %v1537
        %v1548 = vpack.c.b16 %v1540, %v1539
        %1557 = vmatpush.bf16.msra.mxu0 %v1548
        %1558 = vmatpush.bf16.msra.mxu0 %v1547
        %1559 = vmatpush.bf16.msra.mxu0 %v1546
        %1560 = vmatpush.bf16.msra.mxu0 %v1545
        %1561 = vmatpush.bf16.msra.mxu0 %v1544
        %1562 = vmatpush.bf16.msra.mxu0 %v1543
        %1563 = vmatpush.bf16.msra.mxu0 %v1542
        %1564 = vmatpush.bf16.msra.mxu0 %v1541
        %1565 = vmatmul.bf16.gmra.mxu0 %v1119
        %v1566 = vpop.f32.mrf.mxu0
        %v1567 = vadd.f32 0.0, %v1566
        %v1568 = vpop.f32.mrf.mxu0
        %v1569 = vadd.f32 0.0, %v1568
        %1570 = vmatmul.bf16.gmra.mxu0 %v1120
        %v1571 = vpop.f32.mrf.mxu0
        %v1572 = vadd.f32 0.0, %v1571
        %v1573 = vpop.f32.mrf.mxu0
        %v1574 = vadd.f32 0.0, %v1573
        %1575 = vmatmul.bf16.gmra.mxu0 %v1121
        %v1576 = vpop.f32.mrf.mxu0
        %v1577 = vadd.f32 0.0, %v1576
        %v1578 = vpop.f32.mrf.mxu0
        %v1579 = vadd.f32 0.0, %v1578
        %1580 = vmatmul.bf16.gmra.mxu0 %v1122
        %v1581 = vpop.f32.mrf.mxu0
        %v1582 = vadd.f32 0.0, %v1581
        %v1583 = vpop.f32.mrf.mxu0
        %v1584 = vadd.f32 0.0, %v1583
        %1585 = vmatmul.bf16.gmra.mxu0 %v1123
        %v1586 = vpop.f32.mrf.mxu0
        %v1587 = vadd.f32 0.0, %v1586
        %v1588 = vpop.f32.mrf.mxu0
        %v1589 = vadd.f32 0.0, %v1588
        %1590 = vmatmul.bf16.gmra.mxu0 %v1124
        %v1591 = vpop.f32.mrf.mxu0
        %v1592 = vadd.f32 0.0, %v1591
        %v1593 = vpop.f32.mrf.mxu0
        %v1594 = vadd.f32 0.0, %v1593
        %1595 = vmatmul.bf16.gmra.mxu0 %v1125
        %v1596 = vpop.f32.mrf.mxu0
        %v1597 = vadd.f32 0.0, %v1596
        %v1598 = vpop.f32.mrf.mxu0
        %v1599 = vadd.f32 0.0, %v1598
        %1600 = vmatmul.bf16.gmra.mxu0 %v1126
        %v1601 = vpop.f32.mrf.mxu0
        %v1602 = vadd.f32 0.0, %v1601
        %v1603 = vpop.f32.mrf.mxu0
        %v1604 = vadd.f32 0.0, %v1603
        %1605 = vmatmul.bf16.gmra.mxu0 %v1127
        %v1606 = vpop.f32.mrf.mxu0
        %v1607 = vadd.f32 0.0, %v1606
        %v1608 = vpop.f32.mrf.mxu0
        %v1609 = vadd.f32 0.0, %v1608
        %1610 = vmatmul.bf16.gmra.mxu0 %v1128
        %v1611 = vpop.f32.mrf.mxu0
        %v1612 = vadd.f32 0.0, %v1611
        %v1613 = vpop.f32.mrf.mxu0
        %v1614 = vadd.f32 0.0, %v1613
        %1615 = vmatmul.bf16.gmra.mxu0 %v1129
        %v1616 = vpop.f32.mrf.mxu0
        %v1617 = vadd.f32 0.0, %v1616
        %v1618 = vpop.f32.mrf.mxu0
        %v1619 = vadd.f32 0.0, %v1618
        %1620 = vmatmul.bf16.gmra.mxu0 %v1130
        %v1621 = vpop.f32.mrf.mxu0
        %v1622 = vadd.f32 0.0, %v1621
        %v1623 = vpop.f32.mrf.mxu0
        %v1624 = vadd.f32 0.0, %v1623
        %1625 = vmatmul.bf16.gmra.mxu0 %v1131
        %v1626 = vpop.f32.mrf.mxu0
        %v1627 = vadd.f32 0.0, %v1626
        %v1628 = vpop.f32.mrf.mxu0
        %v1629 = vadd.f32 0.0, %v1628
        %1630 = vmatmul.bf16.gmra.mxu0 %v1132
        %v1631 = vpop.f32.mrf.mxu0
        %v1632 = vadd.f32 0.0, %v1631
        %v1633 = vpop.f32.mrf.mxu0
        %v1634 = vadd.f32 0.0, %v1633
        %1635 = vmatmul.bf16.gmra.mxu0 %v1133
        %v1636 = vpop.f32.mrf.mxu0
        %v1637 = vadd.f32 0.0, %v1636
        %v1638 = vpop.f32.mrf.mxu0
        %v1639 = vadd.f32 0.0, %v1638
        %1640 = vmatmul.bf16.gmra.mxu0 %v1134
        %v1641 = vpop.f32.mrf.mxu0
        %v1642 = vadd.f32 0.0, %v1641
        %v1643 = vpop.f32.mrf.mxu0
        %v1644 = vadd.f32 0.0, %v1643
        %1645 = vdwg.mxu0
        %v1662 = vunpack.c.l.b16 %v1477
        %v1663 = vunpack.c.l.b16 %v1478
        %v1664 = vunpack.c.l.b16 %v1479
        %v1665 = vunpack.c.l.b16 %v1480
        %v1666 = vunpack.c.l.b16 %v1481
        %v1667 = vunpack.c.l.b16 %v1482
        %v1668 = vunpack.c.l.b16 %v1483
        %v1669 = vunpack.c.l.b16 %v1484
        %v1670 = vunpack.c.l.b16 %v1485
        %v1671 = vunpack.c.l.b16 %v1486
        %v1672 = vunpack.c.l.b16 %v1487
        %v1673 = vunpack.c.l.b16 %v1488
        %v1674 = vunpack.c.l.b16 %v1489
        %v1675 = vunpack.c.l.b16 %v1490
        %v1676 = vunpack.c.l.b16 %v1491
        %v1677 = vunpack.c.l.b16 %v1492
        %v1678 = vpack.c.b16 %v1663, %v1662
        %v1679 = vpack.c.b16 %v1665, %v1664
        %v1680 = vpack.c.b16 %v1667, %v1666
        %v1681 = vpack.c.b16 %v1669, %v1668
        %v1682 = vpack.c.b16 %v1671, %v1670
        %v1683 = vpack.c.b16 %v1673, %v1672
        %v1684 = vpack.c.b16 %v1675, %v1674
        %v1685 = vpack.c.b16 %v1677, %v1676
        %1694 = vmatpush.bf16.msra.mxu0 %v1685
        %1695 = vmatpush.bf16.msra.mxu0 %v1684
        %1696 = vmatpush.bf16.msra.mxu0 %v1683
        %1697 = vmatpush.bf16.msra.mxu0 %v1682
        %1698 = vmatpush.bf16.msra.mxu0 %v1681
        %1699 = vmatpush.bf16.msra.mxu0 %v1680
        %1700 = vmatpush.bf16.msra.mxu0 %v1679
        %1701 = vmatpush.bf16.msra.mxu0 %v1678
        %1702 = vmatmul.bf16.gmra.mxu0 %v909
        %v1703 = vpop.f32.mrf.mxu0
        %v1704 = vadd.f32 %v1567, %v1703
        %v1705 = vpop.f32.mrf.mxu0
        %v1706 = vadd.f32 %v1569, %v1705
        %1707 = vmatmul.bf16.gmra.mxu0 %v910
        %v1708 = vpop.f32.mrf.mxu0
        %v1709 = vadd.f32 %v1572, %v1708
        %v1710 = vpop.f32.mrf.mxu0
        %v1711 = vadd.f32 %v1574, %v1710
        %1712 = vmatmul.bf16.gmra.mxu0 %v911
        %v1713 = vpop.f32.mrf.mxu0
        %v1714 = vadd.f32 %v1577, %v1713
        %v1715 = vpop.f32.mrf.mxu0
        %v1716 = vadd.f32 %v1579, %v1715
        %1717 = vmatmul.bf16.gmra.mxu0 %v912
        %v1718 = vpop.f32.mrf.mxu0
        %v1719 = vadd.f32 %v1582, %v1718
        %v1720 = vpop.f32.mrf.mxu0
        %v1721 = vadd.f32 %v1584, %v1720
        %1722 = vmatmul.bf16.gmra.mxu0 %v913
        %v1723 = vpop.f32.mrf.mxu0
        %v1724 = vadd.f32 %v1587, %v1723
        %v1725 = vpop.f32.mrf.mxu0
        %v1726 = vadd.f32 %v1589, %v1725
        %1727 = vmatmul.bf16.gmra.mxu0 %v914
        %v1728 = vpop.f32.mrf.mxu0
        %v1729 = vadd.f32 %v1592, %v1728
        %v1730 = vpop.f32.mrf.mxu0
        %v1731 = vadd.f32 %v1594, %v1730
        %1732 = vmatmul.bf16.gmra.mxu0 %v915
        %v1733 = vpop.f32.mrf.mxu0
        %v1734 = vadd.f32 %v1597, %v1733
        %v1735 = vpop.f32.mrf.mxu0
        %v1736 = vadd.f32 %v1599, %v1735
        %1737 = vmatmul.bf16.gmra.mxu0 %v916
        %v1738 = vpop.f32.mrf.mxu0
        %v1739 = vadd.f32 %v1602, %v1738
        %v1740 = vpop.f32.mrf.mxu0
        %v1741 = vadd.f32 %v1604, %v1740
        %1742 = vmatmul.bf16.gmra.mxu0 %v1054
        %v1743 = vpop.f32.mrf.mxu0
        %v1744 = vadd.f32 %v1607, %v1743
        %v1745 = vpop.f32.mrf.mxu0
        %v1746 = vadd.f32 %v1609, %v1745
        %1747 = vmatmul.bf16.gmra.mxu0 %v1055
        %v1748 = vpop.f32.mrf.mxu0
        %v1749 = vadd.f32 %v1612, %v1748
        %v1750 = vpop.f32.mrf.mxu0
        %v1751 = vadd.f32 %v1614, %v1750
        %1752 = vmatmul.bf16.gmra.mxu0 %v1056
        %v1753 = vpop.f32.mrf.mxu0
        %v1754 = vadd.f32 %v1617, %v1753
        %v1755 = vpop.f32.mrf.mxu0
        %v1756 = vadd.f32 %v1619, %v1755
        %1757 = vmatmul.bf16.gmra.mxu0 %v1057
        %v1758 = vpop.f32.mrf.mxu0
        %v1759 = vadd.f32 %v1622, %v1758
        %v1760 = vpop.f32.mrf.mxu0
        %v1761 = vadd.f32 %v1624, %v1760
        %1762 = vmatmul.bf16.gmra.mxu0 %v1058
        %v1763 = vpop.f32.mrf.mxu0
        %v1764 = vadd.f32 %v1627, %v1763
        %v1765 = vpop.f32.mrf.mxu0
        %v1766 = vadd.f32 %v1629, %v1765
        %1767 = vmatmul.bf16.gmra.mxu0 %v1059
        %v1768 = vpop.f32.mrf.mxu0
        %v1769 = vadd.f32 %v1632, %v1768
        %v1770 = vpop.f32.mrf.mxu0
        %v1771 = vadd.f32 %v1634, %v1770
        %1772 = vmatmul.bf16.gmra.mxu0 %v1060
        %v1773 = vpop.f32.mrf.mxu0
        %v1774 = vadd.f32 %v1637, %v1773
        %v1775 = vpop.f32.mrf.mxu0
        %v1776 = vadd.f32 %v1639, %v1775
        %1777 = vmatmul.bf16.gmra.mxu0 %v1061
        %v1778 = vpop.f32.mrf.mxu0
        %v1779 = vadd.f32 %v1642, %v1778
        %v1780 = vpop.f32.mrf.mxu0
        %v1781 = vadd.f32 %v1644, %v1780
        %1782 = vdwg.mxu0
        %v1783 = vld [vmem:[%s6] sm:$0x1]
        %v1785 = vperm.slane %v1783, 0
        %v1787 = vadd.f32 %v1704, %v1785
        %v1788 = vadd.f32 %v1706, %v1785
        %v1789 = vadd.f32 %v1709, %v1785
        %v1790 = vadd.f32 %v1711, %v1785
        %v1791 = vadd.f32 %v1714, %v1785
        %v1792 = vadd.f32 %v1716, %v1785
        %v1793 = vadd.f32 %v1719, %v1785
        %v1794 = vadd.f32 %v1721, %v1785
        %v1795 = vadd.f32 %v1724, %v1785
        %v1796 = vadd.f32 %v1726, %v1785
        %v1797 = vadd.f32 %v1729, %v1785
        %v1798 = vadd.f32 %v1731, %v1785
        %v1799 = vadd.f32 %v1734, %v1785
        %v1800 = vadd.f32 %v1736, %v1785
        %v1801 = vadd.f32 %v1739, %v1785
        %v1802 = vadd.f32 %v1741, %v1785
        %v1803 = vadd.f32 %v1744, %v1785
        %v1804 = vadd.f32 %v1746, %v1785
        %v1805 = vadd.f32 %v1749, %v1785
        %v1806 = vadd.f32 %v1751, %v1785
        %v1807 = vadd.f32 %v1754, %v1785
        %v1808 = vadd.f32 %v1756, %v1785
        %v1809 = vadd.f32 %v1759, %v1785
        %v1810 = vadd.f32 %v1761, %v1785
        %v1811 = vadd.f32 %v1764, %v1785
        %v1812 = vadd.f32 %v1766, %v1785
        %v1813 = vadd.f32 %v1769, %v1785
        %v1814 = vadd.f32 %v1771, %v1785
        %v1815 = vadd.f32 %v1774, %v1785
        %v1816 = vadd.f32 %v1776, %v1785
        %v1817 = vadd.f32 %v1779, %v1785
        %v1818 = vadd.f32 %v1781, %v1785
        %v1819 = vmul.f32 %v1787, 0.01
        %v1820 = vmul.f32 %v1788, 0.01
        %v1821 = vmul.f32 %v1789, 0.01
        %v1822 = vmul.f32 %v1790, 0.01
        %v1823 = vmul.f32 %v1791, 0.01
        %v1824 = vmul.f32 %v1792, 0.01
        %v1825 = vmul.f32 %v1793, 0.01
        %v1826 = vmul.f32 %v1794, 0.01
        %v1827 = vmul.f32 %v1795, 0.01
        %v1828 = vmul.f32 %v1796, 0.01
        %v1829 = vmul.f32 %v1797, 0.01
        %v1830 = vmul.f32 %v1798, 0.01
        %v1831 = vmul.f32 %v1799, 0.01
        %v1832 = vmul.f32 %v1800, 0.01
        %v1833 = vmul.f32 %v1801, 0.01
        %v1834 = vmul.f32 %v1802, 0.01
        %v1835 = vmul.f32 %v1803, 0.01
        %v1836 = vmul.f32 %v1804, 0.01
        %v1837 = vmul.f32 %v1805, 0.01
        %v1838 = vmul.f32 %v1806, 0.01
        %v1839 = vmul.f32 %v1807, 0.01
        %v1840 = vmul.f32 %v1808, 0.01
        %v1841 = vmul.f32 %v1809, 0.01
        %v1842 = vmul.f32 %v1810, 0.01
        %v1843 = vmul.f32 %v1811, 0.01
        %v1844 = vmul.f32 %v1812, 0.01
        %v1845 = vmul.f32 %v1813, 0.01
        %v1846 = vmul.f32 %v1814, 0.01
        %v1847 = vmul.f32 %v1815, 0.01
        %v1848 = vmul.f32 %v1816, 0.01
        %v1849 = vmul.f32 %v1817, 0.01
        %v1850 = vmul.f32 %v1818, 0.01
        %v1851 = vmax.f32 %v1787, %v1819
        %v1852 = vmax.f32 %v1788, %v1820
        %v1853 = vmax.f32 %v1789, %v1821
        %v1854 = vmax.f32 %v1790, %v1822
        %v1855 = vmax.f32 %v1791, %v1823
        %v1856 = vmax.f32 %v1792, %v1824
        %v1857 = vmax.f32 %v1793, %v1825
        %v1858 = vmax.f32 %v1794, %v1826
        %v1859 = vmax.f32 %v1795, %v1827
        %v1860 = vmax.f32 %v1796, %v1828
        %v1861 = vmax.f32 %v1797, %v1829
        %v1862 = vmax.f32 %v1798, %v1830
        %v1863 = vmax.f32 %v1799, %v1831
        %v1864 = vmax.f32 %v1800, %v1832
        %v1865 = vmax.f32 %v1801, %v1833
        %v1866 = vmax.f32 %v1802, %v1834
        %v1867 = vmax.f32 %v1803, %v1835
        %v1868 = vmax.f32 %v1804, %v1836
        %v1869 = vmax.f32 %v1805, %v1837
        %v1870 = vmax.f32 %v1806, %v1838
        %v1871 = vmax.f32 %v1807, %v1839
        %v1872 = vmax.f32 %v1808, %v1840
        %v1873 = vmax.f32 %v1809, %v1841
        %v1874 = vmax.f32 %v1810, %v1842
        %v1875 = vmax.f32 %v1811, %v1843
        %v1876 = vmax.f32 %v1812, %v1844
        %v1877 = vmax.f32 %v1813, %v1845
        %v1878 = vmax.f32 %v1814, %v1846
        %v1879 = vmax.f32 %v1815, %v1847
        %v1880 = vmax.f32 %v1816, %v1848
        %v1881 = vmax.f32 %v1817, %v1849
        %v1882 = vmax.f32 %v1818, %v1850
        %v1883 = vpack.c.bf16 %v1851, %v1851
        %v1884 = vpack.c.bf16 %v1852, %v1852
        %v1885 = vpack.c.bf16 %v1853, %v1853
        %v1886 = vpack.c.bf16 %v1854, %v1854
        %v1887 = vpack.c.bf16 %v1855, %v1855
        %v1888 = vpack.c.bf16 %v1856, %v1856
        %v1889 = vpack.c.bf16 %v1857, %v1857
        %v1890 = vpack.c.bf16 %v1858, %v1858
        %v1891 = vpack.c.bf16 %v1859, %v1859
        %v1892 = vpack.c.bf16 %v1860, %v1860
        %v1893 = vpack.c.bf16 %v1861, %v1861
        %v1894 = vpack.c.bf16 %v1862, %v1862
        %v1895 = vpack.c.bf16 %v1863, %v1863
        %v1896 = vpack.c.bf16 %v1864, %v1864
        %v1897 = vpack.c.bf16 %v1865, %v1865
        %v1898 = vpack.c.bf16 %v1866, %v1866
        %v1899 = vpack.c.bf16 %v1867, %v1867
        %v1900 = vpack.c.bf16 %v1868, %v1868
        %v1901 = vpack.c.bf16 %v1869, %v1869
        %v1902 = vpack.c.bf16 %v1870, %v1870
        %v1903 = vpack.c.bf16 %v1871, %v1871
        %v1904 = vpack.c.bf16 %v1872, %v1872
        %v1905 = vpack.c.bf16 %v1873, %v1873
        %v1906 = vpack.c.bf16 %v1874, %v1874
        %v1907 = vpack.c.bf16 %v1875, %v1875
        %v1908 = vpack.c.bf16 %v1876, %v1876
        %v1909 = vpack.c.bf16 %v1877, %v1877
        %v1910 = vpack.c.bf16 %v1878, %v1878
        %v1911 = vpack.c.bf16 %v1879, %v1879
        %v1912 = vpack.c.bf16 %v1880, %v1880
        %v1913 = vpack.c.bf16 %v1881, %v1881
        %v1914 = vpack.c.bf16 %v1882, %v1882
        %v1931 = vunpack.c.l.b16 %v1883
        %v1932 = vunpack.c.l.b16 %v1884
        %v1933 = vunpack.c.l.b16 %v1885
        %v1934 = vunpack.c.l.b16 %v1886
        %v1935 = vunpack.c.l.b16 %v1887
        %v1936 = vunpack.c.l.b16 %v1888
        %v1937 = vunpack.c.l.b16 %v1889
        %v1938 = vunpack.c.l.b16 %v1890
        %v1939 = vunpack.c.l.b16 %v1891
        %v1940 = vunpack.c.l.b16 %v1892
        %v1941 = vunpack.c.l.b16 %v1893
        %v1942 = vunpack.c.l.b16 %v1894
        %v1943 = vunpack.c.l.b16 %v1895
        %v1944 = vunpack.c.l.b16 %v1896
        %v1945 = vunpack.c.l.b16 %v1897
        %v1946 = vunpack.c.l.b16 %v1898
        %v1947 = vpack.c.b16 %v1932, %v1931
        %v1948 = vpack.c.b16 %v1934, %v1933
        %v1949 = vpack.c.b16 %v1936, %v1935
        %v1950 = vpack.c.b16 %v1938, %v1937
        %v1951 = vpack.c.b16 %v1940, %v1939
        %v1952 = vpack.c.b16 %v1942, %v1941
        %v1953 = vpack.c.b16 %v1944, %v1943
        %v1954 = vpack.c.b16 %v1946, %v1945
        %1963 = vmatpush.bf16.msra.mxu0 %v1954
        %1964 = vmatpush.bf16.msra.mxu0 %v1953
        %1965 = vmatpush.bf16.msra.mxu0 %v1952
        %1966 = vmatpush.bf16.msra.mxu0 %v1951
        %1967 = vmatpush.bf16.msra.mxu0 %v1950
        %1968 = vmatpush.bf16.msra.mxu0 %v1949
        %1969 = vmatpush.bf16.msra.mxu0 %v1948
        %1970 = vmatpush.bf16.msra.mxu0 %v1947
        %1971 = vmatmul.bf16.gmra.mxu0 %v861
        %v1972 = vpop.f32.mrf.mxu0
        %v1973 = vadd.f32 0.0, %v1972
        %v1974 = vpop.f32.mrf.mxu0
        %v1975 = vadd.f32 0.0, %v1974
        %1976 = vmatmul.bf16.gmra.mxu0 %v862
        %v1977 = vpop.f32.mrf.mxu0
        %v1978 = vadd.f32 0.0, %v1977
        %v1979 = vpop.f32.mrf.mxu0
        %v1980 = vadd.f32 0.0, %v1979
        %1981 = vmatmul.bf16.gmra.mxu0 %v863
        %v1982 = vpop.f32.mrf.mxu0
        %v1983 = vadd.f32 0.0, %v1982
        %v1984 = vpop.f32.mrf.mxu0
        %v1985 = vadd.f32 0.0, %v1984
        %1986 = vmatmul.bf16.gmra.mxu0 %v864
        %v1987 = vpop.f32.mrf.mxu0
        %v1988 = vadd.f32 0.0, %v1987
        %v1989 = vpop.f32.mrf.mxu0
        %v1990 = vadd.f32 0.0, %v1989
        %1991 = vmatmul.bf16.gmra.mxu0 %v865
        %v1992 = vpop.f32.mrf.mxu0
        %v1993 = vadd.f32 0.0, %v1992
        %v1994 = vpop.f32.mrf.mxu0
        %v1995 = vadd.f32 0.0, %v1994
        %1996 = vmatmul.bf16.gmra.mxu0 %v866
        %v1997 = vpop.f32.mrf.mxu0
        %v1998 = vadd.f32 0.0, %v1997
        %v1999 = vpop.f32.mrf.mxu0
        %v2000 = vadd.f32 0.0, %v1999
        %2001 = vmatmul.bf16.gmra.mxu0 %v867
        %v2002 = vpop.f32.mrf.mxu0
        %v2003 = vadd.f32 0.0, %v2002
        %v2004 = vpop.f32.mrf.mxu0
        %v2005 = vadd.f32 0.0, %v2004
        %2006 = vmatmul.bf16.gmra.mxu0 %v868
        %v2007 = vpop.f32.mrf.mxu0
        %v2008 = vadd.f32 0.0, %v2007
        %v2009 = vpop.f32.mrf.mxu0
        %v2010 = vadd.f32 0.0, %v2009
        %2011 = vdwg.mxu0
        %v2028 = vunpack.c.l.b16 %v1899
        %v2029 = vunpack.c.l.b16 %v1900
        %v2030 = vunpack.c.l.b16 %v1901
        %v2031 = vunpack.c.l.b16 %v1902
        %v2032 = vunpack.c.l.b16 %v1903
        %v2033 = vunpack.c.l.b16 %v1904
        %v2034 = vunpack.c.l.b16 %v1905
        %v2035 = vunpack.c.l.b16 %v1906
        %v2036 = vunpack.c.l.b16 %v1907
        %v2037 = vunpack.c.l.b16 %v1908
        %v2038 = vunpack.c.l.b16 %v1909
        %v2039 = vunpack.c.l.b16 %v1910
        %v2040 = vunpack.c.l.b16 %v1911
        %v2041 = vunpack.c.l.b16 %v1912
        %v2042 = vunpack.c.l.b16 %v1913
        %v2043 = vunpack.c.l.b16 %v1914
        %v2044 = vpack.c.b16 %v2029, %v2028
        %v2045 = vpack.c.b16 %v2031, %v2030
        %v2046 = vpack.c.b16 %v2033, %v2032
        %v2047 = vpack.c.b16 %v2035, %v2034
        %v2048 = vpack.c.b16 %v2037, %v2036
        %v2049 = vpack.c.b16 %v2039, %v2038
        %v2050 = vpack.c.b16 %v2041, %v2040
        %v2051 = vpack.c.b16 %v2043, %v2042
        %2060 = vmatpush.bf16.msra.mxu0 %v2051
        %2061 = vmatpush.bf16.msra.mxu0 %v2050
        %2062 = vmatpush.bf16.msra.mxu0 %v2049
        %2063 = vmatpush.bf16.msra.mxu0 %v2048
        %2064 = vmatpush.bf16.msra.mxu0 %v2047
        %2065 = vmatpush.bf16.msra.mxu0 %v2046
        %2066 = vmatpush.bf16.msra.mxu0 %v2045
        %2067 = vmatpush.bf16.msra.mxu0 %v2044
        %2068 = vmatmul.bf16.gmra.mxu0 %v1006
        %v2069 = vpop.f32.mrf.mxu0
        %v2070 = vadd.f32 0.0, %v2069
        %v2071 = vpop.f32.mrf.mxu0
        %v2072 = vadd.f32 0.0, %v2071
        %2073 = vmatmul.bf16.gmra.mxu0 %v1007
        %v2074 = vpop.f32.mrf.mxu0
        %v2075 = vadd.f32 0.0, %v2074
        %v2076 = vpop.f32.mrf.mxu0
        %v2077 = vadd.f32 0.0, %v2076
        %2078 = vmatmul.bf16.gmra.mxu0 %v1008
        %v2079 = vpop.f32.mrf.mxu0
        %v2080 = vadd.f32 0.0, %v2079
        %v2081 = vpop.f32.mrf.mxu0
        %v2082 = vadd.f32 0.0, %v2081
        %2083 = vmatmul.bf16.gmra.mxu0 %v1009
        %v2084 = vpop.f32.mrf.mxu0
        %v2085 = vadd.f32 0.0, %v2084
        %v2086 = vpop.f32.mrf.mxu0
        %v2087 = vadd.f32 0.0, %v2086
        %2088 = vmatmul.bf16.gmra.mxu0 %v1010
        %v2089 = vpop.f32.mrf.mxu0
        %v2090 = vadd.f32 0.0, %v2089
        %v2091 = vpop.f32.mrf.mxu0
        %v2092 = vadd.f32 0.0, %v2091
        %2093 = vmatmul.bf16.gmra.mxu0 %v1011
        %v2094 = vpop.f32.mrf.mxu0
        %v2095 = vadd.f32 0.0, %v2094
        %v2096 = vpop.f32.mrf.mxu0
        %v2097 = vadd.f32 0.0, %v2096
        %2098 = vmatmul.bf16.gmra.mxu0 %v1012
        %v2099 = vpop.f32.mrf.mxu0
        %v2100 = vadd.f32 0.0, %v2099
        %v2101 = vpop.f32.mrf.mxu0
        %v2102 = vadd.f32 0.0, %v2101
        %2103 = vmatmul.bf16.gmra.mxu0 %v1013
        %v2104 = vpop.f32.mrf.mxu0
        %v2105 = vadd.f32 0.0, %v2104
        %v2106 = vpop.f32.mrf.mxu0
        %v2107 = vadd.f32 0.0, %v2106
        %2108 = vdwg.mxu0
        %v2109 = vpack.c.bf16 %v1975, %v1973
        %v2110 = vpack.c.bf16 %v1980, %v1978
        %v2111 = vpack.c.bf16 %v1985, %v1983
        %v2112 = vpack.c.bf16 %v1990, %v1988
        %v2113 = vpack.c.bf16 %v1995, %v1993
        %v2114 = vpack.c.bf16 %v2000, %v1998
        %v2115 = vpack.c.bf16 %v2005, %v2003
        %v2116 = vpack.c.bf16 %v2010, %v2008
        %v2117 = vpack.c.bf16 %v2072, %v2070
        %v2118 = vpack.c.bf16 %v2077, %v2075
        %v2119 = vpack.c.bf16 %v2082, %v2080
        %v2120 = vpack.c.bf16 %v2087, %v2085
        %v2121 = vpack.c.bf16 %v2092, %v2090
        %v2122 = vpack.c.bf16 %v2097, %v2095
        %v2123 = vpack.c.bf16 %v2102, %v2100
        %v2124 = vpack.c.bf16 %v2107, %v2105
        %v2125 = vld [vmem:[%s7] sm:$0xf]
        %v2126 = vld [vmem:[%s7 + $0x4] sm:$0xf]
        %v2127 = vld [vmem:[%s7 + $0x8] sm:$0xf]
        %v2128 = vld [vmem:[%s7 + $0xc] sm:$0xf]
        %v2129 = vld [vmem:[%s7 + $0x10] sm:$0xf]
        %v2130 = vld [vmem:[%s7 + $0x14] sm:$0xf]
        %v2131 = vld [vmem:[%s7 + $0x18] sm:$0xf]
        %v2132 = vld [vmem:[%s7 + $0x1c] sm:$0xf]
        %v2133 = vld [vmem:[%s7 + $0x20] sm:$0xf]
        %v2134 = vld [vmem:[%s7 + $0x24] sm:$0xf]
        %v2135 = vld [vmem:[%s7 + $0x28] sm:$0xf]
        %v2136 = vld [vmem:[%s7 + $0x2c] sm:$0xf]
        %v2137 = vld [vmem:[%s7 + $0x30] sm:$0xf]
        %v2138 = vld [vmem:[%s7 + $0x34] sm:$0xf]
        %v2139 = vld [vmem:[%s7 + $0x38] sm:$0xf]
        %v2140 = vld [vmem:[%s7 + $0x3c] sm:$0xf]
        %v2141 = vld [vmem:[%s8] sm:$0xf]
        %v2142 = vld [vmem:[%s8 + $0x4] sm:$0xf]
        %v2143 = vld [vmem:[%s8 + $0x8] sm:$0xf]
        %v2144 = vld [vmem:[%s8 + $0xc] sm:$0xf]
        %v2145 = vld [vmem:[%s8 + $0x10] sm:$0xf]
        %v2146 = vld [vmem:[%s8 + $0x14] sm:$0xf]
        %v2147 = vld [vmem:[%s8 + $0x18] sm:$0xf]
        %v2148 = vld [vmem:[%s8 + $0x1c] sm:$0xf]
        %v2149 = vld [vmem:[%s8 + $0x20] sm:$0xf]
        %v2150 = vld [vmem:[%s8 + $0x24] sm:$0xf]
        %v2151 = vld [vmem:[%s8 + $0x28] sm:$0xf]
        %v2152 = vld [vmem:[%s8 + $0x2c] sm:$0xf]
        %v2153 = vld [vmem:[%s8 + $0x30] sm:$0xf]
        %v2154 = vld [vmem:[%s8 + $0x34] sm:$0xf]
        %v2155 = vld [vmem:[%s8 + $0x38] sm:$0xf]
        %v2156 = vld [vmem:[%s8 + $0x3c] sm:$0xf]
        %v2173 = vunpack.c.l.b16 %v2141
        %v2174 = vunpack.c.l.b16 %v2142
        %v2175 = vunpack.c.l.b16 %v2143
        %v2176 = vunpack.c.l.b16 %v2144
        %v2177 = vunpack.c.l.b16 %v2145
        %v2178 = vunpack.c.l.b16 %v2146
        %v2179 = vunpack.c.l.b16 %v2147
        %v2180 = vunpack.c.l.b16 %v2148
        %v2181 = vunpack.c.l.b16 %v2149
        %v2182 = vunpack.c.l.b16 %v2150
        %v2183 = vunpack.c.l.b16 %v2151
        %v2184 = vunpack.c.l.b16 %v2152
        %v2185 = vunpack.c.l.b16 %v2153
        %v2186 = vunpack.c.l.b16 %v2154
        %v2187 = vunpack.c.l.b16 %v2155
        %v2188 = vunpack.c.l.b16 %v2156
        %v2189 = vpack.c.b16 %v2174, %v2173
        %v2190 = vpack.c.b16 %v2176, %v2175
        %v2191 = vpack.c.b16 %v2178, %v2177
        %v2192 = vpack.c.b16 %v2180, %v2179
        %v2193 = vpack.c.b16 %v2182, %v2181
        %v2194 = vpack.c.b16 %v2184, %v2183
        %v2195 = vpack.c.b16 %v2186, %v2185
        %v2196 = vpack.c.b16 %v2188, %v2187
        %2205 = vmatpush.bf16.msra.mxu0 %v2196
        %2206 = vmatpush.bf16.msra.mxu0 %v2195
        %2207 = vmatpush.bf16.msra.mxu0 %v2194
        %2208 = vmatpush.bf16.msra.mxu0 %v2193
        %2209 = vmatpush.bf16.msra.mxu0 %v2192
        %2210 = vmatpush.bf16.msra.mxu0 %v2191
        %2211 = vmatpush.bf16.msra.mxu0 %v2190
        %2212 = vmatpush.bf16.msra.mxu0 %v2189
        %2213 = vmatmul.bf16.gmra.mxu0 %v2109
        %v2214 = vpop.f32.mrf.mxu0
        %v2215 = vadd.f32 0.0, %v2214
        %v2216 = vpop.f32.mrf.mxu0
        %v2217 = vadd.f32 0.0, %v2216
        %2218 = vmatmul.bf16.gmra.mxu0 %v2110
        %v2219 = vpop.f32.mrf.mxu0
        %v2220 = vadd.f32 0.0, %v2219
        %v2221 = vpop.f32.mrf.mxu0
        %v2222 = vadd.f32 0.0, %v2221
        %2223 = vmatmul.bf16.gmra.mxu0 %v2111
        %v2224 = vpop.f32.mrf.mxu0
        %v2225 = vadd.f32 0.0, %v2224
        %v2226 = vpop.f32.mrf.mxu0
        %v2227 = vadd.f32 0.0, %v2226
        %2228 = vmatmul.bf16.gmra.mxu0 %v2112
        %v2229 = vpop.f32.mrf.mxu0
        %v2230 = vadd.f32 0.0, %v2229
        %v2231 = vpop.f32.mrf.mxu0
        %v2232 = vadd.f32 0.0, %v2231
        %2233 = vmatmul.bf16.gmra.mxu0 %v2113
        %v2234 = vpop.f32.mrf.mxu0
        %v2235 = vadd.f32 0.0, %v2234
        %v2236 = vpop.f32.mrf.mxu0
        %v2237 = vadd.f32 0.0, %v2236
        %2238 = vmatmul.bf16.gmra.mxu0 %v2114
        %v2239 = vpop.f32.mrf.mxu0
        %v2240 = vadd.f32 0.0, %v2239
        %v2241 = vpop.f32.mrf.mxu0
        %v2242 = vadd.f32 0.0, %v2241
        %2243 = vmatmul.bf16.gmra.mxu0 %v2115
        %v2244 = vpop.f32.mrf.mxu0
        %v2245 = vadd.f32 0.0, %v2244
        %v2246 = vpop.f32.mrf.mxu0
        %v2247 = vadd.f32 0.0, %v2246
        %2248 = vmatmul.bf16.gmra.mxu0 %v2116
        %v2249 = vpop.f32.mrf.mxu0
        %v2250 = vadd.f32 0.0, %v2249
        %v2251 = vpop.f32.mrf.mxu0
        %v2252 = vadd.f32 0.0, %v2251
        %2253 = vmatmul.bf16.gmra.mxu0 %v2117
        %v2254 = vpop.f32.mrf.mxu0
        %v2255 = vadd.f32 0.0, %v2254
        %v2256 = vpop.f32.mrf.mxu0
        %v2257 = vadd.f32 0.0, %v2256
        %2258 = vmatmul.bf16.gmra.mxu0 %v2118
        %v2259 = vpop.f32.mrf.mxu0
        %v2260 = vadd.f32 0.0, %v2259
        %v2261 = vpop.f32.mrf.mxu0
        %v2262 = vadd.f32 0.0, %v2261
        %2263 = vmatmul.bf16.gmra.mxu0 %v2119
        %v2264 = vpop.f32.mrf.mxu0
        %v2265 = vadd.f32 0.0, %v2264
        %v2266 = vpop.f32.mrf.mxu0
        %v2267 = vadd.f32 0.0, %v2266
        %2268 = vmatmul.bf16.gmra.mxu0 %v2120
        %v2269 = vpop.f32.mrf.mxu0
        %v2270 = vadd.f32 0.0, %v2269
        %v2271 = vpop.f32.mrf.mxu0
        %v2272 = vadd.f32 0.0, %v2271
        %2273 = vmatmul.bf16.gmra.mxu0 %v2121
        %v2274 = vpop.f32.mrf.mxu0
        %v2275 = vadd.f32 0.0, %v2274
        %v2276 = vpop.f32.mrf.mxu0
        %v2277 = vadd.f32 0.0, %v2276
        %2278 = vmatmul.bf16.gmra.mxu0 %v2122
        %v2279 = vpop.f32.mrf.mxu0
        %v2280 = vadd.f32 0.0, %v2279
        %v2281 = vpop.f32.mrf.mxu0
        %v2282 = vadd.f32 0.0, %v2281
        %2283 = vmatmul.bf16.gmra.mxu0 %v2123
        %v2284 = vpop.f32.mrf.mxu0
        %v2285 = vadd.f32 0.0, %v2284
        %v2286 = vpop.f32.mrf.mxu0
        %v2287 = vadd.f32 0.0, %v2286
        %2288 = vmatmul.bf16.gmra.mxu0 %v2124
        %v2289 = vpop.f32.mrf.mxu0
        %v2290 = vadd.f32 0.0, %v2289
        %v2291 = vpop.f32.mrf.mxu0
        %v2292 = vadd.f32 0.0, %v2291
        %2293 = vdwg.mxu0
        %v2310 = vunpack.c.l.b16 %v2125
        %v2311 = vunpack.c.l.b16 %v2126
        %v2312 = vunpack.c.l.b16 %v2127
        %v2313 = vunpack.c.l.b16 %v2128
        %v2314 = vunpack.c.l.b16 %v2129
        %v2315 = vunpack.c.l.b16 %v2130
        %v2316 = vunpack.c.l.b16 %v2131
        %v2317 = vunpack.c.l.b16 %v2132
        %v2318 = vunpack.c.l.b16 %v2133
        %v2319 = vunpack.c.l.b16 %v2134
        %v2320 = vunpack.c.l.b16 %v2135
        %v2321 = vunpack.c.l.b16 %v2136
        %v2322 = vunpack.c.l.b16 %v2137
        %v2323 = vunpack.c.l.b16 %v2138
        %v2324 = vunpack.c.l.b16 %v2139
        %v2325 = vunpack.c.l.b16 %v2140
        %v2326 = vpack.c.b16 %v2311, %v2310
        %v2327 = vpack.c.b16 %v2313, %v2312
        %v2328 = vpack.c.b16 %v2315, %v2314
        %v2329 = vpack.c.b16 %v2317, %v2316
        %v2330 = vpack.c.b16 %v2319, %v2318
        %v2331 = vpack.c.b16 %v2321, %v2320
        %v2332 = vpack.c.b16 %v2323, %v2322
        %v2333 = vpack.c.b16 %v2325, %v2324
        %2342 = vmatpush.bf16.msra.mxu0 %v2333
        %2343 = vmatpush.bf16.msra.mxu0 %v2332
        %2344 = vmatpush.bf16.msra.mxu0 %v2331
        %2345 = vmatpush.bf16.msra.mxu0 %v2330
        %2346 = vmatpush.bf16.msra.mxu0 %v2329
        %2347 = vmatpush.bf16.msra.mxu0 %v2328
        %2348 = vmatpush.bf16.msra.mxu0 %v2327
        %2349 = vmatpush.bf16.msra.mxu0 %v2326
        %2350 = vmatmul.bf16.gmra.mxu0 %v1947
        %v2351 = vpop.f32.mrf.mxu0
        %v2352 = vadd.f32 %v2215, %v2351
        %v2353 = vpop.f32.mrf.mxu0
        %v2354 = vadd.f32 %v2217, %v2353
        %2355 = vmatmul.bf16.gmra.mxu0 %v1948
        %v2356 = vpop.f32.mrf.mxu0
        %v2357 = vadd.f32 %v2220, %v2356
        %v2358 = vpop.f32.mrf.mxu0
        %v2359 = vadd.f32 %v2222, %v2358
        %2360 = vmatmul.bf16.gmra.mxu0 %v1949
        %v2361 = vpop.f32.mrf.mxu0
        %v2362 = vadd.f32 %v2225, %v2361
        %v2363 = vpop.f32.mrf.mxu0
        %v2364 = vadd.f32 %v2227, %v2363
        %2365 = vmatmul.bf16.gmra.mxu0 %v1950
        %v2366 = vpop.f32.mrf.mxu0
        %v2367 = vadd.f32 %v2230, %v2366
        %v2368 = vpop.f32.mrf.mxu0
        %v2369 = vadd.f32 %v2232, %v2368
        %2370 = vmatmul.bf16.gmra.mxu0 %v1951
        %v2371 = vpop.f32.mrf.mxu0
        %v2372 = vadd.f32 %v2235, %v2371
        %v2373 = vpop.f32.mrf.mxu0
        %v2374 = vadd.f32 %v2237, %v2373
        %2375 = vmatmul.bf16.gmra.mxu0 %v1952
        %v2376 = vpop.f32.mrf.mxu0
        %v2377 = vadd.f32 %v2240, %v2376
        %v2378 = vpop.f32.mrf.mxu0
        %v2379 = vadd.f32 %v2242, %v2378
        %2380 = vmatmul.bf16.gmra.mxu0 %v1953
        %v2381 = vpop.f32.mrf.mxu0
        %v2382 = vadd.f32 %v2245, %v2381
        %v2383 = vpop.f32.mrf.mxu0
        %v2384 = vadd.f32 %v2247, %v2383
        %2385 = vmatmul.bf16.gmra.mxu0 %v1954
        %v2386 = vpop.f32.mrf.mxu0
        %v2387 = vadd.f32 %v2250, %v2386
        %v2388 = vpop.f32.mrf.mxu0
        %v2389 = vadd.f32 %v2252, %v2388
        %2390 = vmatmul.bf16.gmra.mxu0 %v2044
        %v2391 = vpop.f32.mrf.mxu0
        %v2392 = vadd.f32 %v2255, %v2391
        %v2393 = vpop.f32.mrf.mxu0
        %v2394 = vadd.f32 %v2257, %v2393
        %2395 = vmatmul.bf16.gmra.mxu0 %v2045
        %v2396 = vpop.f32.mrf.mxu0
        %v2397 = vadd.f32 %v2260, %v2396
        %v2398 = vpop.f32.mrf.mxu0
        %v2399 = vadd.f32 %v2262, %v2398
        %2400 = vmatmul.bf16.gmra.mxu0 %v2046
        %v2401 = vpop.f32.mrf.mxu0
        %v2402 = vadd.f32 %v2265, %v2401
        %v2403 = vpop.f32.mrf.mxu0
        %v2404 = vadd.f32 %v2267, %v2403
        %2405 = vmatmul.bf16.gmra.mxu0 %v2047
        %v2406 = vpop.f32.mrf.mxu0
        %v2407 = vadd.f32 %v2270, %v2406
        %v2408 = vpop.f32.mrf.mxu0
        %v2409 = vadd.f32 %v2272, %v2408
        %2410 = vmatmul.bf16.gmra.mxu0 %v2048
        %v2411 = vpop.f32.mrf.mxu0
        %v2412 = vadd.f32 %v2275, %v2411
        %v2413 = vpop.f32.mrf.mxu0
        %v2414 = vadd.f32 %v2277, %v2413
        %2415 = vmatmul.bf16.gmra.mxu0 %v2049
        %v2416 = vpop.f32.mrf.mxu0
        %v2417 = vadd.f32 %v2280, %v2416
        %v2418 = vpop.f32.mrf.mxu0
        %v2419 = vadd.f32 %v2282, %v2418
        %2420 = vmatmul.bf16.gmra.mxu0 %v2050
        %v2421 = vpop.f32.mrf.mxu0
        %v2422 = vadd.f32 %v2285, %v2421
        %v2423 = vpop.f32.mrf.mxu0
        %v2424 = vadd.f32 %v2287, %v2423
        %2425 = vmatmul.bf16.gmra.mxu0 %v2051
        %v2426 = vpop.f32.mrf.mxu0
        %v2427 = vadd.f32 %v2290, %v2426
        %v2428 = vpop.f32.mrf.mxu0
        %v2429 = vadd.f32 %v2292, %v2428
        %2430 = vdwg.mxu0
        %v2431 = vld [vmem:[%s9] sm:$0x1]
        %v2433 = vperm.slane %v2431, 0
        %v2435 = vadd.f32 %v2352, %v2433
        %v2436 = vadd.f32 %v2354, %v2433
        %v2437 = vadd.f32 %v2357, %v2433
        %v2438 = vadd.f32 %v2359, %v2433
        %v2439 = vadd.f32 %v2362, %v2433
        %v2440 = vadd.f32 %v2364, %v2433
        %v2441 = vadd.f32 %v2367, %v2433
        %v2442 = vadd.f32 %v2369, %v2433
        %v2443 = vadd.f32 %v2372, %v2433
        %v2444 = vadd.f32 %v2374, %v2433
        %v2445 = vadd.f32 %v2377, %v2433
        %v2446 = vadd.f32 %v2379, %v2433
        %v2447 = vadd.f32 %v2382, %v2433
        %v2448 = vadd.f32 %v2384, %v2433
        %v2449 = vadd.f32 %v2387, %v2433
        %v2450 = vadd.f32 %v2389, %v2433
        %v2451 = vadd.f32 %v2392, %v2433
        %v2452 = vadd.f32 %v2394, %v2433
        %v2453 = vadd.f32 %v2397, %v2433
        %v2454 = vadd.f32 %v2399, %v2433
        %v2455 = vadd.f32 %v2402, %v2433
        %v2456 = vadd.f32 %v2404, %v2433
        %v2457 = vadd.f32 %v2407, %v2433
        %v2458 = vadd.f32 %v2409, %v2433
        %v2459 = vadd.f32 %v2412, %v2433
        %v2460 = vadd.f32 %v2414, %v2433
        %v2461 = vadd.f32 %v2417, %v2433
        %v2462 = vadd.f32 %v2419, %v2433
        %v2463 = vadd.f32 %v2422, %v2433
        %v2464 = vadd.f32 %v2424, %v2433
        %v2465 = vadd.f32 %v2427, %v2433
        %v2466 = vadd.f32 %v2429, %v2433
        %v2467 = vpack.c.bf16 %v656, %v654
        %v2468 = vpack.c.bf16 %v661, %v659
        %v2469 = vpack.c.bf16 %v666, %v664
        %v2470 = vpack.c.bf16 %v671, %v669
        %v2471 = vpack.c.bf16 %v676, %v674
        %v2472 = vpack.c.bf16 %v681, %v679
        %v2473 = vpack.c.bf16 %v686, %v684
        %v2474 = vpack.c.bf16 %v691, %v689
        %v2475 = vpack.c.bf16 %v696, %v694
        %v2476 = vpack.c.bf16 %v701, %v699
        %v2477 = vpack.c.bf16 %v706, %v704
        %v2478 = vpack.c.bf16 %v711, %v709
        %v2479 = vpack.c.bf16 %v716, %v714
        %v2480 = vpack.c.bf16 %v721, %v719
        %v2481 = vpack.c.bf16 %v726, %v724
        %v2482 = vpack.c.bf16 %v731, %v729
        %v2483 = vld [vmem:[%s10] sm:$0xf]
        %v2484 = vld [vmem:[%s10 + $0x4] sm:$0xf]
        %v2485 = vld [vmem:[%s10 + $0x8] sm:$0xf]
        %v2486 = vld [vmem:[%s10 + $0xc] sm:$0xf]
        %v2487 = vld [vmem:[%s10 + $0x10] sm:$0xf]
        %v2488 = vld [vmem:[%s10 + $0x14] sm:$0xf]
        %v2489 = vld [vmem:[%s10 + $0x18] sm:$0xf]
        %v2490 = vld [vmem:[%s10 + $0x1c] sm:$0xf]
        %v2491 = vld [vmem:[%s10 + $0x20] sm:$0xf]
        %v2492 = vld [vmem:[%s10 + $0x24] sm:$0xf]
        %v2493 = vld [vmem:[%s10 + $0x28] sm:$0xf]
        %v2494 = vld [vmem:[%s10 + $0x2c] sm:$0xf]
        %v2495 = vld [vmem:[%s10 + $0x30] sm:$0xf]
        %v2496 = vld [vmem:[%s10 + $0x34] sm:$0xf]
        %v2497 = vld [vmem:[%s10 + $0x38] sm:$0xf]
        %v2498 = vld [vmem:[%s10 + $0x3c] sm:$0xf]
        %v2499 = vpack.c.bf16 %v1446, %v1445
        %v2500 = vpack.c.bf16 %v1448, %v1447
        %v2501 = vpack.c.bf16 %v1450, %v1449
        %v2502 = vpack.c.bf16 %v1452, %v1451
        %v2503 = vpack.c.bf16 %v1454, %v1453
        %v2504 = vpack.c.bf16 %v1456, %v1455
        %v2505 = vpack.c.bf16 %v1458, %v1457
        %v2506 = vpack.c.bf16 %v1460, %v1459
        %v2507 = vpack.c.bf16 %v1462, %v1461
        %v2508 = vpack.c.bf16 %v1464, %v1463
        %v2509 = vpack.c.bf16 %v1466, %v1465
        %v2510 = vpack.c.bf16 %v1468, %v1467
        %v2511 = vpack.c.bf16 %v1470, %v1469
        %v2512 = vpack.c.bf16 %v1472, %v1471
        %v2513 = vpack.c.bf16 %v1474, %v1473
        %v2514 = vpack.c.bf16 %v1476, %v1475
        %v2515 = vld [vmem:[%s10 + $0x40] sm:$0xf]
        %v2516 = vld [vmem:[%s10 + $0x44] sm:$0xf]
        %v2517 = vld [vmem:[%s10 + $0x48] sm:$0xf]
        %v2518 = vld [vmem:[%s10 + $0x4c] sm:$0xf]
        %v2519 = vld [vmem:[%s10 + $0x50] sm:$0xf]
        %v2520 = vld [vmem:[%s10 + $0x54] sm:$0xf]
        %v2521 = vld [vmem:[%s10 + $0x58] sm:$0xf]
        %v2522 = vld [vmem:[%s10 + $0x5c] sm:$0xf]
        %v2523 = vld [vmem:[%s10 + $0x60] sm:$0xf]
        %v2524 = vld [vmem:[%s10 + $0x64] sm:$0xf]
        %v2525 = vld [vmem:[%s10 + $0x68] sm:$0xf]
        %v2526 = vld [vmem:[%s10 + $0x6c] sm:$0xf]
        %v2527 = vld [vmem:[%s10 + $0x70] sm:$0xf]
        %v2528 = vld [vmem:[%s10 + $0x74] sm:$0xf]
        %v2529 = vld [vmem:[%s10 + $0x78] sm:$0xf]
        %v2530 = vld [vmem:[%s10 + $0x7c] sm:$0xf]
        %v2547 = vunpack.c.l.b16 %v2515
        %v2548 = vunpack.c.l.b16 %v2516
        %v2549 = vunpack.c.l.b16 %v2517
        %v2550 = vunpack.c.l.b16 %v2518
        %v2551 = vunpack.c.l.b16 %v2519
        %v2552 = vunpack.c.l.b16 %v2520
        %v2553 = vunpack.c.l.b16 %v2521
        %v2554 = vunpack.c.l.b16 %v2522
        %v2555 = vunpack.c.l.b16 %v2523
        %v2556 = vunpack.c.l.b16 %v2524
        %v2557 = vunpack.c.l.b16 %v2525
        %v2558 = vunpack.c.l.b16 %v2526
        %v2559 = vunpack.c.l.b16 %v2527
        %v2560 = vunpack.c.l.b16 %v2528
        %v2561 = vunpack.c.l.b16 %v2529
        %v2562 = vunpack.c.l.b16 %v2530
        %v2563 = vpack.c.b16 %v2548, %v2547
        %v2564 = vpack.c.b16 %v2550, %v2549
        %v2565 = vpack.c.b16 %v2552, %v2551
        %v2566 = vpack.c.b16 %v2554, %v2553
        %v2567 = vpack.c.b16 %v2556, %v2555
        %v2568 = vpack.c.b16 %v2558, %v2557
        %v2569 = vpack.c.b16 %v2560, %v2559
        %v2570 = vpack.c.b16 %v2562, %v2561
        %2579 = vmatpush.bf16.msra.mxu0 %v2570
        %2580 = vmatpush.bf16.msra.mxu0 %v2569
        %2581 = vmatpush.bf16.msra.mxu0 %v2568
        %2582 = vmatpush.bf16.msra.mxu0 %v2567
        %2583 = vmatpush.bf16.msra.mxu0 %v2566
        %2584 = vmatpush.bf16.msra.mxu0 %v2565
        %2585 = vmatpush.bf16.msra.mxu0 %v2564
        %2586 = vmatpush.bf16.msra.mxu0 %v2563
        %2587 = vmatmul.bf16.gmra.mxu0 %v2499
        %v2588 = vpop.f32.mrf.mxu0
        %v2589 = vadd.f32 0.0, %v2588
        %v2590 = vpop.f32.mrf.mxu0
        %v2591 = vadd.f32 0.0, %v2590
        %2592 = vmatmul.bf16.gmra.mxu0 %v2500
        %v2593 = vpop.f32.mrf.mxu0
        %v2594 = vadd.f32 0.0, %v2593
        %v2595 = vpop.f32.mrf.mxu0
        %v2596 = vadd.f32 0.0, %v2595
        %2597 = vmatmul.bf16.gmra.mxu0 %v2501
        %v2598 = vpop.f32.mrf.mxu0
        %v2599 = vadd.f32 0.0, %v2598
        %v2600 = vpop.f32.mrf.mxu0
        %v2601 = vadd.f32 0.0, %v2600
        %2602 = vmatmul.bf16.gmra.mxu0 %v2502
        %v2603 = vpop.f32.mrf.mxu0
        %v2604 = vadd.f32 0.0, %v2603
        %v2605 = vpop.f32.mrf.mxu0
        %v2606 = vadd.f32 0.0, %v2605
        %2607 = vmatmul.bf16.gmra.mxu0 %v2503
        %v2608 = vpop.f32.mrf.mxu0
        %v2609 = vadd.f32 0.0, %v2608
        %v2610 = vpop.f32.mrf.mxu0
        %v2611 = vadd.f32 0.0, %v2610
        %2612 = vmatmul.bf16.gmra.mxu0 %v2504
        %v2613 = vpop.f32.mrf.mxu0
        %v2614 = vadd.f32 0.0, %v2613
        %v2615 = vpop.f32.mrf.mxu0
        %v2616 = vadd.f32 0.0, %v2615
        %2617 = vmatmul.bf16.gmra.mxu0 %v2505
        %v2618 = vpop.f32.mrf.mxu0
        %v2619 = vadd.f32 0.0, %v2618
        %v2620 = vpop.f32.mrf.mxu0
        %v2621 = vadd.f32 0.0, %v2620
        %2622 = vmatmul.bf16.gmra.mxu0 %v2506
        %v2623 = vpop.f32.mrf.mxu0
        %v2624 = vadd.f32 0.0, %v2623
        %v2625 = vpop.f32.mrf.mxu0
        %v2626 = vadd.f32 0.0, %v2625
        %2627 = vmatmul.bf16.gmra.mxu0 %v2507
        %v2628 = vpop.f32.mrf.mxu0
        %v2629 = vadd.f32 0.0, %v2628
        %v2630 = vpop.f32.mrf.mxu0
        %v2631 = vadd.f32 0.0, %v2630
        %2632 = vmatmul.bf16.gmra.mxu0 %v2508
        %v2633 = vpop.f32.mrf.mxu0
        %v2634 = vadd.f32 0.0, %v2633
        %v2635 = vpop.f32.mrf.mxu0
        %v2636 = vadd.f32 0.0, %v2635
        %2637 = vmatmul.bf16.gmra.mxu0 %v2509
        %v2638 = vpop.f32.mrf.mxu0
        %v2639 = vadd.f32 0.0, %v2638
        %v2640 = vpop.f32.mrf.mxu0
        %v2641 = vadd.f32 0.0, %v2640
        %2642 = vmatmul.bf16.gmra.mxu0 %v2510
        %v2643 = vpop.f32.mrf.mxu0
        %v2644 = vadd.f32 0.0, %v2643
        %v2645 = vpop.f32.mrf.mxu0
        %v2646 = vadd.f32 0.0, %v2645
        %2647 = vmatmul.bf16.gmra.mxu0 %v2511
        %v2648 = vpop.f32.mrf.mxu0
        %v2649 = vadd.f32 0.0, %v2648
        %v2650 = vpop.f32.mrf.mxu0
        %v2651 = vadd.f32 0.0, %v2650
        %2652 = vmatmul.bf16.gmra.mxu0 %v2512
        %v2653 = vpop.f32.mrf.mxu0
        %v2654 = vadd.f32 0.0, %v2653
        %v2655 = vpop.f32.mrf.mxu0
        %v2656 = vadd.f32 0.0, %v2655
        %2657 = vmatmul.bf16.gmra.mxu0 %v2513
        %v2658 = vpop.f32.mrf.mxu0
        %v2659 = vadd.f32 0.0, %v2658
        %v2660 = vpop.f32.mrf.mxu0
        %v2661 = vadd.f32 0.0, %v2660
        %2662 = vmatmul.bf16.gmra.mxu0 %v2514
        %v2663 = vpop.f32.mrf.mxu0
        %v2664 = vadd.f32 0.0, %v2663
        %v2665 = vpop.f32.mrf.mxu0
        %v2666 = vadd.f32 0.0, %v2665
        %2667 = vdwg.mxu0
        %v2684 = vunpack.c.l.b16 %v2483
        %v2685 = vunpack.c.l.b16 %v2484
        %v2686 = vunpack.c.l.b16 %v2485
        %v2687 = vunpack.c.l.b16 %v2486
        %v2688 = vunpack.c.l.b16 %v2487
        %v2689 = vunpack.c.l.b16 %v2488
        %v2690 = vunpack.c.l.b16 %v2489
        %v2691 = vunpack.c.l.b16 %v2490
        %v2692 = vunpack.c.l.b16 %v2491
        %v2693 = vunpack.c.l.b16 %v2492
        %v2694 = vunpack.c.l.b16 %v2493
        %v2695 = vunpack.c.l.b16 %v2494
        %v2696 = vunpack.c.l.b16 %v2495
        %v2697 = vunpack.c.l.b16 %v2496
        %v2698 = vunpack.c.l.b16 %v2497
        %v2699 = vunpack.c.l.b16 %v2498
        %v2700 = vpack.c.b16 %v2685, %v2684
        %v2701 = vpack.c.b16 %v2687, %v2686
        %v2702 = vpack.c.b16 %v2689, %v2688
        %v2703 = vpack.c.b16 %v2691, %v2690
        %v2704 = vpack.c.b16 %v2693, %v2692
        %v2705 = vpack.c.b16 %v2695, %v2694
        %v2706 = vpack.c.b16 %v2697, %v2696
        %v2707 = vpack.c.b16 %v2699, %v2698
        %2716 = vmatpush.bf16.msra.mxu0 %v2707
        %2717 = vmatpush.bf16.msra.mxu0 %v2706
        %2718 = vmatpush.bf16.msra.mxu0 %v2705
        %2719 = vmatpush.bf16.msra.mxu0 %v2704
        %2720 = vmatpush.bf16.msra.mxu0 %v2703
        %2721 = vmatpush.bf16.msra.mxu0 %v2702
        %2722 = vmatpush.bf16.msra.mxu0 %v2701
        %2723 = vmatpush.bf16.msra.mxu0 %v2700
        %2724 = vmatmul.bf16.gmra.mxu0 %v2467
        %v2725 = vpop.f32.mrf.mxu0
        %v2726 = vadd.f32 %v2589, %v2725
        %v2727 = vpop.f32.mrf.mxu0
        %v2728 = vadd.f32 %v2591, %v2727
        %2729 = vmatmul.bf16.gmra.mxu0 %v2468
        %v2730 = vpop.f32.mrf.mxu0
        %v2731 = vadd.f32 %v2594, %v2730
        %v2732 = vpop.f32.mrf.mxu0
        %v2733 = vadd.f32 %v2596, %v2732
        %2734 = vmatmul.bf16.gmra.mxu0 %v2469
        %v2735 = vpop.f32.mrf.mxu0
        %v2736 = vadd.f32 %v2599, %v2735
        %v2737 = vpop.f32.mrf.mxu0
        %v2738 = vadd.f32 %v2601, %v2737
        %2739 = vmatmul.bf16.gmra.mxu0 %v2470
        %v2740 = vpop.f32.mrf.mxu0
        %v2741 = vadd.f32 %v2604, %v2740
        %v2742 = vpop.f32.mrf.mxu0
        %v2743 = vadd.f32 %v2606, %v2742
        %2744 = vmatmul.bf16.gmra.mxu0 %v2471
        %v2745 = vpop.f32.mrf.mxu0
        %v2746 = vadd.f32 %v2609, %v2745
        %v2747 = vpop.f32.mrf.mxu0
        %v2748 = vadd.f32 %v2611, %v2747
        %2749 = vmatmul.bf16.gmra.mxu0 %v2472
        %v2750 = vpop.f32.mrf.mxu0
        %v2751 = vadd.f32 %v2614, %v2750
        %v2752 = vpop.f32.mrf.mxu0
        %v2753 = vadd.f32 %v2616, %v2752
        %2754 = vmatmul.bf16.gmra.mxu0 %v2473
        %v2755 = vpop.f32.mrf.mxu0
        %v2756 = vadd.f32 %v2619, %v2755
        %v2757 = vpop.f32.mrf.mxu0
        %v2758 = vadd.f32 %v2621, %v2757
        %2759 = vmatmul.bf16.gmra.mxu0 %v2474
        %v2760 = vpop.f32.mrf.mxu0
        %v2761 = vadd.f32 %v2624, %v2760
        %v2762 = vpop.f32.mrf.mxu0
        %v2763 = vadd.f32 %v2626, %v2762
        %2764 = vmatmul.bf16.gmra.mxu0 %v2475
        %v2765 = vpop.f32.mrf.mxu0
        %v2766 = vadd.f32 %v2629, %v2765
        %v2767 = vpop.f32.mrf.mxu0
        %v2768 = vadd.f32 %v2631, %v2767
        %2769 = vmatmul.bf16.gmra.mxu0 %v2476
        %v2770 = vpop.f32.mrf.mxu0
        %v2771 = vadd.f32 %v2634, %v2770
        %v2772 = vpop.f32.mrf.mxu0
        %v2773 = vadd.f32 %v2636, %v2772
        %2774 = vmatmul.bf16.gmra.mxu0 %v2477
        %v2775 = vpop.f32.mrf.mxu0
        %v2776 = vadd.f32 %v2639, %v2775
        %v2777 = vpop.f32.mrf.mxu0
        %v2778 = vadd.f32 %v2641, %v2777
        %2779 = vmatmul.bf16.gmra.mxu0 %v2478
        %v2780 = vpop.f32.mrf.mxu0
        %v2781 = vadd.f32 %v2644, %v2780
        %v2782 = vpop.f32.mrf.mxu0
        %v2783 = vadd.f32 %v2646, %v2782
        %2784 = vmatmul.bf16.gmra.mxu0 %v2479
        %v2785 = vpop.f32.mrf.mxu0
        %v2786 = vadd.f32 %v2649, %v2785
        %v2787 = vpop.f32.mrf.mxu0
        %v2788 = vadd.f32 %v2651, %v2787
        %2789 = vmatmul.bf16.gmra.mxu0 %v2480
        %v2790 = vpop.f32.mrf.mxu0
        %v2791 = vadd.f32 %v2654, %v2790
        %v2792 = vpop.f32.mrf.mxu0
        %v2793 = vadd.f32 %v2656, %v2792
        %2794 = vmatmul.bf16.gmra.mxu0 %v2481
        %v2795 = vpop.f32.mrf.mxu0
        %v2796 = vadd.f32 %v2659, %v2795
        %v2797 = vpop.f32.mrf.mxu0
        %v2798 = vadd.f32 %v2661, %v2797
        %2799 = vmatmul.bf16.gmra.mxu0 %v2482
        %v2800 = vpop.f32.mrf.mxu0
        %v2801 = vadd.f32 %v2664, %v2800
        %v2802 = vpop.f32.mrf.mxu0
        %v2803 = vadd.f32 %v2666, %v2802
        %2804 = vdwg.mxu0
        %v2805 = vpack.c.bf16 %v2436, %v2435
        %v2806 = vpack.c.bf16 %v2438, %v2437
        %v2807 = vpack.c.bf16 %v2440, %v2439
        %v2808 = vpack.c.bf16 %v2442, %v2441
        %v2809 = vpack.c.bf16 %v2444, %v2443
        %v2810 = vpack.c.bf16 %v2446, %v2445
        %v2811 = vpack.c.bf16 %v2448, %v2447
        %v2812 = vpack.c.bf16 %v2450, %v2449
        %v2813 = vpack.c.bf16 %v2452, %v2451
        %v2814 = vpack.c.bf16 %v2454, %v2453
        %v2815 = vpack.c.bf16 %v2456, %v2455
        %v2816 = vpack.c.bf16 %v2458, %v2457
        %v2817 = vpack.c.bf16 %v2460, %v2459
        %v2818 = vpack.c.bf16 %v2462, %v2461
        %v2819 = vpack.c.bf16 %v2464, %v2463
        %v2820 = vpack.c.bf16 %v2466, %v2465
        %v2821 = vld [vmem:[%s10 + $0x80] sm:$0xf]
        %v2822 = vld [vmem:[%s10 + $0x84] sm:$0xf]
        %v2823 = vld [vmem:[%s10 + $0x88] sm:$0xf]
        %v2824 = vld [vmem:[%s10 + $0x8c] sm:$0xf]
        %v2825 = vld [vmem:[%s10 + $0x90] sm:$0xf]
        %v2826 = vld [vmem:[%s10 + $0x94] sm:$0xf]
        %v2827 = vld [vmem:[%s10 + $0x98] sm:$0xf]
        %v2828 = vld [vmem:[%s10 + $0x9c] sm:$0xf]
        %v2829 = vld [vmem:[%s10 + $0xa0] sm:$0xf]
        %v2830 = vld [vmem:[%s10 + $0xa4] sm:$0xf]
        %v2831 = vld [vmem:[%s10 + $0xa8] sm:$0xf]
        %v2832 = vld [vmem:[%s10 + $0xac] sm:$0xf]
        %v2833 = vld [vmem:[%s10 + $0xb0] sm:$0xf]
        %v2834 = vld [vmem:[%s10 + $0xb4] sm:$0xf]
        %v2835 = vld [vmem:[%s10 + $0xb8] sm:$0xf]
        %v2836 = vld [vmem:[%s10 + $0xbc] sm:$0xf]
        %v2853 = vunpack.c.l.b16 %v2821
        %v2854 = vunpack.c.l.b16 %v2822
        %v2855 = vunpack.c.l.b16 %v2823
        %v2856 = vunpack.c.l.b16 %v2824
        %v2857 = vunpack.c.l.b16 %v2825
        %v2858 = vunpack.c.l.b16 %v2826
        %v2859 = vunpack.c.l.b16 %v2827
        %v2860 = vunpack.c.l.b16 %v2828
        %v2861 = vunpack.c.l.b16 %v2829
        %v2862 = vunpack.c.l.b16 %v2830
        %v2863 = vunpack.c.l.b16 %v2831
        %v2864 = vunpack.c.l.b16 %v2832
        %v2865 = vunpack.c.l.b16 %v2833
        %v2866 = vunpack.c.l.b16 %v2834
        %v2867 = vunpack.c.l.b16 %v2835
        %v2868 = vunpack.c.l.b16 %v2836
        %v2869 = vpack.c.b16 %v2854, %v2853
        %v2870 = vpack.c.b16 %v2856, %v2855
        %v2871 = vpack.c.b16 %v2858, %v2857
        %v2872 = vpack.c.b16 %v2860, %v2859
        %v2873 = vpack.c.b16 %v2862, %v2861
        %v2874 = vpack.c.b16 %v2864, %v2863
        %v2875 = vpack.c.b16 %v2866, %v2865
        %v2876 = vpack.c.b16 %v2868, %v2867
        %2885 = vmatpush.bf16.msra.mxu0 %v2876
        %2886 = vmatpush.bf16.msra.mxu0 %v2875
        %2887 = vmatpush.bf16.msra.mxu0 %v2874
        %2888 = vmatpush.bf16.msra.mxu0 %v2873
        %2889 = vmatpush.bf16.msra.mxu0 %v2872
        %2890 = vmatpush.bf16.msra.mxu0 %v2871
        %2891 = vmatpush.bf16.msra.mxu0 %v2870
        %2892 = vmatpush.bf16.msra.mxu0 %v2869
        %2893 = vmatmul.bf16.gmra.mxu0 %v2805
        %v2894 = vpop.f32.mrf.mxu0
        %v2895 = vadd.f32 0.0, %v2894
        %v2896 = vpop.f32.mrf.mxu0
        %v2897 = vadd.f32 0.0, %v2896
        %2898 = vmatmul.bf16.gmra.mxu0 %v2806
        %v2899 = vpop.f32.mrf.mxu0
        %v2900 = vadd.f32 0.0, %v2899
        %v2901 = vpop.f32.mrf.mxu0
        %v2902 = vadd.f32 0.0, %v2901
        %2903 = vmatmul.bf16.gmra.mxu0 %v2807
        %v2904 = vpop.f32.mrf.mxu0
        %v2905 = vadd.f32 0.0, %v2904
        %v2906 = vpop.f32.mrf.mxu0
        %v2907 = vadd.f32 0.0, %v2906
        %2908 = vmatmul.bf16.gmra.mxu0 %v2808
        %v2909 = vpop.f32.mrf.mxu0
        %v2910 = vadd.f32 0.0, %v2909
        %v2911 = vpop.f32.mrf.mxu0
        %v2912 = vadd.f32 0.0, %v2911
        %2913 = vmatmul.bf16.gmra.mxu0 %v2809
        %v2914 = vpop.f32.mrf.mxu0
        %v2915 = vadd.f32 0.0, %v2914
        %v2916 = vpop.f32.mrf.mxu0
        %v2917 = vadd.f32 0.0, %v2916
        %2918 = vmatmul.bf16.gmra.mxu0 %v2810
        %v2919 = vpop.f32.mrf.mxu0
        %v2920 = vadd.f32 0.0, %v2919
        %v2921 = vpop.f32.mrf.mxu0
        %v2922 = vadd.f32 0.0, %v2921
        %2923 = vmatmul.bf16.gmra.mxu0 %v2811
        %v2924 = vpop.f32.mrf.mxu0
        %v2925 = vadd.f32 0.0, %v2924
        %v2926 = vpop.f32.mrf.mxu0
        %v2927 = vadd.f32 0.0, %v2926
        %2928 = vmatmul.bf16.gmra.mxu0 %v2812
        %v2929 = vpop.f32.mrf.mxu0
        %v2930 = vadd.f32 0.0, %v2929
        %v2931 = vpop.f32.mrf.mxu0
        %v2932 = vadd.f32 0.0, %v2931
        %2933 = vmatmul.bf16.gmra.mxu0 %v2813
        %v2934 = vpop.f32.mrf.mxu0
        %v2935 = vadd.f32 0.0, %v2934
        %v2936 = vpop.f32.mrf.mxu0
        %v2937 = vadd.f32 0.0, %v2936
        %2938 = vmatmul.bf16.gmra.mxu0 %v2814
        %v2939 = vpop.f32.mrf.mxu0
        %v2940 = vadd.f32 0.0, %v2939
        %v2941 = vpop.f32.mrf.mxu0
        %v2942 = vadd.f32 0.0, %v2941
        %2943 = vmatmul.bf16.gmra.mxu0 %v2815
        %v2944 = vpop.f32.mrf.mxu0
        %v2945 = vadd.f32 0.0, %v2944
        %v2946 = vpop.f32.mrf.mxu0
        %v2947 = vadd.f32 0.0, %v2946
        %2948 = vmatmul.bf16.gmra.mxu0 %v2816
        %v2949 = vpop.f32.mrf.mxu0
        %v2950 = vadd.f32 0.0, %v2949
        %v2951 = vpop.f32.mrf.mxu0
        %v2952 = vadd.f32 0.0, %v2951
        %2953 = vmatmul.bf16.gmra.mxu0 %v2817
        %v2954 = vpop.f32.mrf.mxu0
        %v2955 = vadd.f32 0.0, %v2954
        %v2956 = vpop.f32.mrf.mxu0
        %v2957 = vadd.f32 0.0, %v2956
        %2958 = vmatmul.bf16.gmra.mxu0 %v2818
        %v2959 = vpop.f32.mrf.mxu0
        %v2960 = vadd.f32 0.0, %v2959
        %v2961 = vpop.f32.mrf.mxu0
        %v2962 = vadd.f32 0.0, %v2961
        %2963 = vmatmul.bf16.gmra.mxu0 %v2819
        %v2964 = vpop.f32.mrf.mxu0
        %v2965 = vadd.f32 0.0, %v2964
        %v2966 = vpop.f32.mrf.mxu0
        %v2967 = vadd.f32 0.0, %v2966
        %2968 = vmatmul.bf16.gmra.mxu0 %v2820
        %v2969 = vpop.f32.mrf.mxu0
        %v2970 = vadd.f32 0.0, %v2969
        %v2971 = vpop.f32.mrf.mxu0
        %v2972 = vadd.f32 0.0, %v2971
        %2973 = vdwg.mxu0
        %v2974 = vadd.f32 %v2726, %v2895
        %v2975 = vadd.f32 %v2728, %v2897
        %v2976 = vadd.f32 %v2731, %v2900
        %v2977 = vadd.f32 %v2733, %v2902
        %v2978 = vadd.f32 %v2736, %v2905
        %v2979 = vadd.f32 %v2738, %v2907
        %v2980 = vadd.f32 %v2741, %v2910
        %v2981 = vadd.f32 %v2743, %v2912
        %v2982 = vadd.f32 %v2746, %v2915
        %v2983 = vadd.f32 %v2748, %v2917
        %v2984 = vadd.f32 %v2751, %v2920
        %v2985 = vadd.f32 %v2753, %v2922
        %v2986 = vadd.f32 %v2756, %v2925
        %v2987 = vadd.f32 %v2758, %v2927
        %v2988 = vadd.f32 %v2761, %v2930
        %v2989 = vadd.f32 %v2763, %v2932
        %v2990 = vadd.f32 %v2766, %v2935
        %v2991 = vadd.f32 %v2768, %v2937
        %v2992 = vadd.f32 %v2771, %v2940
        %v2993 = vadd.f32 %v2773, %v2942
        %v2994 = vadd.f32 %v2776, %v2945
        %v2995 = vadd.f32 %v2778, %v2947
        %v2996 = vadd.f32 %v2781, %v2950
        %v2997 = vadd.f32 %v2783, %v2952
        %v2998 = vadd.f32 %v2786, %v2955
        %v2999 = vadd.f32 %v2788, %v2957
        %v3000 = vadd.f32 %v2791, %v2960
        %v3001 = vadd.f32 %v2793, %v2962
        %v3002 = vadd.f32 %v2796, %v2965
        %v3003 = vadd.f32 %v2798, %v2967
        %v3004 = vadd.f32 %v2801, %v2970
        %v3005 = vadd.f32 %v2803, %v2972
        %3006 = vst [vmem:[%s400] sm:$0xff] %v2974
        %3007 = vst [vmem:[%s400 + $0x8] sm:$0xff] %v2975
        %3008 = vst [vmem:[%s400 + $0x10] sm:$0xff] %v2976
        %3009 = vst [vmem:[%s400 + $0x18] sm:$0xff] %v2977
        %3010 = vst [vmem:[%s400 + $0x20] sm:$0xff] %v2978
        %3011 = vst [vmem:[%s400 + $0x28] sm:$0xff] %v2979
        %3012 = vst [vmem:[%s400 + $0x30] sm:$0xff] %v2980
        %3013 = vst [vmem:[%s400 + $0x38] sm:$0xff] %v2981
        %3014 = vst [vmem:[%s400 + $0x40] sm:$0xff] %v2982
        %3015 = vst [vmem:[%s400 + $0x48] sm:$0xff] %v2983
        %3016 = vst [vmem:[%s400 + $0x50] sm:$0xff] %v2984
        %3017 = vst [vmem:[%s400 + $0x58] sm:$0xff] %v2985
        %3018 = vst [vmem:[%s400 + $0x60] sm:$0xff] %v2986
        %3019 = vst [vmem:[%s400 + $0x68] sm:$0xff] %v2987
        %3020 = vst [vmem:[%s400 + $0x70] sm:$0xff] %v2988
        %3021 = vst [vmem:[%s400 + $0x78] sm:$0xff] %v2989
        %3022 = vst [vmem:[%s400 + $0x80] sm:$0xff] %v2990
        %3023 = vst [vmem:[%s400 + $0x88] sm:$0xff] %v2991
        %3024 = vst [vmem:[%s400 + $0x90] sm:$0xff] %v2992
        %3025 = vst [vmem:[%s400 + $0x98] sm:$0xff] %v2993
        %3026 = vst [vmem:[%s400 + $0xa0] sm:$0xff] %v2994
        %3027 = vst [vmem:[%s400 + $0xa8] sm:$0xff] %v2995
        %3028 = vst [vmem:[%s400 + $0xb0] sm:$0xff] %v2996
        %3029 = vst [vmem:[%s400 + $0xb8] sm:$0xff] %v2997
        %3030 = vst [vmem:[%s400 + $0xc0] sm:$0xff] %v2998
        %3031 = vst [vmem:[%s400 + $0xc8] sm:$0xff] %v2999
        %3032 = vst [vmem:[%s400 + $0xd0] sm:$0xff] %v3000
        %3033 = vst [vmem:[%s400 + $0xd8] sm:$0xff] %v3001
        %3034 = vst [vmem:[%s400 + $0xe0] sm:$0xff] %v3002
        %3035 = vst [vmem:[%s400 + $0xe8] sm:$0xff] %v3003
        %3036 = vst [vmem:[%s400 + $0xf0] sm:$0xff] %v3004
        %3037 = vst [vmem:[%s400 + $0xf8] sm:$0xff] %v3005
        %s3038 = sand.u32 %s274, 1
        %s3039 = scalar_lea.sflag [#allocation3], %s3038
        %s3040 = sand.u32 %s274, 1
        %s3041 = smul.addr %s3040, 256
        %s3042 = scalar_lea.vmem [#allocation2], %s3041
        // Predicated region
        $region65: #{_lambda_.1} parent=63 // pred_check
          %p3043 = pneg %p284
        $region66: #{_lambda_.1} parent=63 // pred_check_branch
          %3045 = sbr.rel (%p3043) target = $region68
        $region67: #{_lambda_.1} parent=63 // pred_region
          %s3046 = smul.u32 2, %s25
          %3048 = vsyncadd %s3039, 0
          %s3049 = smul.addr %s3046, 16
          %s3050 = smul.addr %s3049, 8
          %s3051 = scalar_lea.hbm %s11, %s3050
          %s3052 = sshll.u32 %s3042, 4
          %s3053 = int_to_ptr.vmem [resolvable:$true] %s3052
          %s3054 = sshll.u32 %s3051, 4
          %s3055 = int_to_ptr.hbm [resolvable:$true] %s3054
          %3060 = dma.vmem_to_hbm [thread:$0]  %s3053, 4096, %s3055, %s3039, 128, 128, 8
        $region68: #{_lambda_.1} parent=63 // pred_fallthru
          _
      $region64: #{_lambda_.1} parent=5 // pred_fallthru
        _
      %p3061 = scmp.le.s32.totalorder 2, %s20
      // Predicated region
      $region69: #{_lambda_.1} parent=5 // pred_check
        %p3062 = pneg %p3061
      $region70: #{_lambda_.1} parent=5 // pred_check_branch
        %3064 = sbr.rel (%p3062) target = $region72
      $region71: #{_lambda_.1} parent=5 // pred_region
        %s3065 = ssub.s32 %s20, 2
        // Predicated region
        $region73: #{_lambda_.1} parent=71 // pred_check
          %p3066 = pneg %p290
        $region74: #{_lambda_.1} parent=71 // pred_check_branch
          %3068 = sbr.rel (%p3066) target = $region76
        $region75: #{_lambda_.1} parent=71 // pred_region
          %s3069 = sand.u32 %s275, 1
          %s3070 = scalar_lea.sflag [#allocation3], %s3069
          %s3071 = sand.u32 %s275, 1
          %s3072 = smul.addr %s3071, 256
          %s3073 = scalar_lea.vmem [#allocation2], %s3072
          %3075 = dma.done %s3070, 4096
        $region76: #{_lambda_.1} parent=71 // pred_fallthru
          _
      $region72: #{_lambda_.1} parent=5 // pred_fallthru
        _
    $region6: #{_lambda_.1} parent=1 // loop_footer
      %s24 = sadd.s32 1, %s20
    $region7: #{_lambda_.1} parent=1 // loop_footer_branch
      %19 = sbr.rel target = $region3
    $region8: #{_lambda_.1} parent=1 // loop_exit
      _
    %3076 = vsyncpa [#allocation3], 1
    %s3077 = scalar_lea.sflag [#allocation3], 1
    %3078 = vsyncpa %s3077, 1

</llo_original>
